<compile_context>
chip_gen: v7x
topology: tpu7x:2x2x1
jax: 0.10.0
libtpu: 0.0.40
codegen_flags: <defaults>
</compile_context>

<pallas_src>
import jax
import jax.numpy as jnp
from jax.experimental import pallas as pl
from jax.experimental.pallas import tpu as pltpu

K_IN = 784          # feature dim (1*28*28); fed un-padded, full last dim
H1 = 512
H2 = 256
N_PAD = 128         # final layer padded 1 -> 128 lanes for the MXU (store is trimmed)
DEFAULT_TB = 256    # batch tile: MXU M-tile multiple, >=2 grid steps for B > 256


def _leaky_relu(x, slope=0.2):
    return jnp.where(x > 0, x, slope * x)


def discriminator_kernel(x_ref, w1_ref, b1_ref, w2_ref, b2_ref, w3_ref, b3_ref,
                         out_ref):
    # Three bf16 MXU matmuls with f32 accumulation; VPU/EUP elementwise in f32.
    x = x_ref[...].astype(jnp.bfloat16)                          # (TB, 784) cast in-kernel

    h1 = jnp.dot(x, w1_ref[...], preferred_element_type=jnp.float32) + b1_ref[...]
    h1 = _leaky_relu(h1)                                         # (TB, 512) f32

    h2 = jnp.dot(h1.astype(jnp.bfloat16), w2_ref[...],
                 preferred_element_type=jnp.float32) + b2_ref[...]
    h2 = _leaky_relu(h2)                                         # (TB, 256) f32

    logits = jnp.dot(h2.astype(jnp.bfloat16), w3_ref[...],
                     preferred_element_type=jnp.float32) + b3_ref[...]  # (TB, 128)
    # Only column 0 is real; trim before the store so HBM writeback is 4 B/row.
    out_ref[...] = jax.nn.sigmoid(logits[:, :1])                 # (TB, 1) f32


def init_params(key):
    """Deterministic init matching PyTorch nn.Linear (stored as (in, out))."""
    dims = [(K_IN, H1), (H1, H2), (H2, 1)]
    params = []
    for fan_in, fan_out in dims:
        key, kw, kb = jax.random.split(key, 3)
        bound = 1.0 / jnp.sqrt(jnp.float32(fan_in))
        w = jax.random.uniform(kw, (fan_in, fan_out), jnp.float32, -bound, bound)
        b = jax.random.uniform(kb, (1, fan_out), jnp.float32, -bound, bound)
        params.extend([w, b])
    return tuple(params)


def _prep_params(params):
    w1, b1, w2, b2, w3, b3 = params
    w1_p = w1.astype(jnp.bfloat16)                                   # (784, 512)
    w2_p = w2.astype(jnp.bfloat16)                                   # (512, 256)
    w3_p = jnp.pad(w3, ((0, 0), (0, N_PAD - w3.shape[1]))).astype(jnp.bfloat16)
    b1_p = b1.astype(jnp.float32)
    b2_p = b2.astype(jnp.float32)
    b3_p = jnp.pad(b3, ((0, 0), (0, N_PAD - b3.shape[1]))).astype(jnp.float32)
    return w1_p, b1_p, w2_p, b2_p, w3_p, b3_p


def _pick_tb(b):
    if b <= DEFAULT_TB:
        # Single grid step; 16-row floor keeps the bf16 (16,128) native tile.
        return max(16, -(-b // 16) * 16)
    return DEFAULT_TB


def discriminator_forward(x_nchw, params):
    b = x_nchw.shape[0]
    # nn.Flatten(): (B, C, H, W) -> (B, C*H*W), row-major; stays f32 in HBM.
    x2d = x_nchw.reshape(b, -1).astype(jnp.float32)
    assert x2d.shape[1] == K_IN, f"expected {K_IN} features, got {x2d.shape[1]}"

    tb = _pick_tb(b)
    b_pad = -(-b // tb) * tb
    if b_pad != b:
        x2d = jnp.pad(x2d, ((0, b_pad - b), (0, 0)))

    w1_p, b1_p, w2_p, b2_p, w3_p, b3_p = _prep_params(params)

    out = pl.pallas_call(
        discriminator_kernel,
        out_shape=jax.ShapeDtypeStruct((b_pad, 1), jnp.float32),
        grid=(b_pad // tb,),
        in_specs=[
            pl.BlockSpec((tb, K_IN), lambda i: (i, 0)),     # x: streamed per step (f32)
            pl.BlockSpec((K_IN, H1), lambda i: (0, 0)),     # weights: constant blocks
            pl.BlockSpec((1, H1), lambda i: (0, 0)),
            pl.BlockSpec((H1, H2), lambda i: (0, 0)),
            pl.BlockSpec((1, H2), lambda i: (0, 0)),
            pl.BlockSpec((H2, N_PAD), lambda i: (0, 0)),
            pl.BlockSpec((1, N_PAD), lambda i: (0, 0)),
        ],
        out_specs=pl.BlockSpec((tb, 1), lambda i: (i, 0)),  # trimmed output
        compiler_params=pltpu.CompilerParams(
            dimension_semantics=("parallel",),   # megacore on v7x, neutral elsewhere
            vmem_limit_bytes=32 * 1024 * 1024,   # kernel needs ~4-5 MiB at TB=256
        ),
    )(x2d, w1_p, b1_p, w2_p, b2_p, w3_p, b3_p)

    return out[:b]  # (B, 1) sigmoid probabilities


def _reference_forward_f32(x_nchw, params):
    w1, b1, w2, b2, w3, b3 = params
    x = x_nchw.reshape(x_nchw.shape[0], -1).astype(jnp.float32)
    h1 = _leaky_relu(x @ w1 + b1)
    h2 = _leaky_relu(h1 @ w2 + b2)
    return jax.nn.sigmoid(h2 @ w3 + b3)


def _reference_forward_bf16(x_nchw, params):
    # Mirrors the kernel's bf16-operand / f32-accumulate numerics.
    w1, b1, w2, b2, w3, b3 = params
    x = x_nchw.reshape(x_nchw.shape[0], -1).astype(jnp.bfloat16)
    h1 = _leaky_relu(jnp.dot(x, w1.astype(jnp.bfloat16),
                             preferred_element_type=jnp.float32) + b1)
    h2 = _leaky_relu(jnp.dot(h1.astype(jnp.bfloat16), w2.astype(jnp.bfloat16),
                             preferred_element_type=jnp.float32) + b2)
    logits = jnp.dot(h2.astype(jnp.bfloat16), w3.astype(jnp.bfloat16),
                     preferred_element_type=jnp.float32) + b3
    return jax.nn.sigmoid(logits)


if __name__ == "__main__":
    key = jax.random.PRNGKey(0)
    k_params, k_x1, k_x2 = jax.random.split(key, 3)

    params = init_params(k_params)

    # Small MNIST-like batch: (B, C, H, W) = (2, 1, 28, 28) -> 784 features.
    x_small = jax.random.normal(k_x1, (2, 1, 28, 28), jnp.float32)
    out_small = jax.block_until_ready(discriminator_forward(x_small, params))
    assert out_small.shape == (2, 1)
    assert jnp.allclose(out_small, _reference_forward_bf16(x_small, params),
                        atol=2e-5, rtol=2e-5)
    assert jnp.allclose(out_small, _reference_forward_f32(x_small, params),
                        atol=3e-2, rtol=3e-2)

    # Larger ragged batch exercising the multi-step grid (600 -> 3 tiles of 256).
    x_big = jax.random.normal(k_x2, (600, 1, 28, 28), jnp.float32)
    out_big = jax.block_until_ready(discriminator_forward(x_big, params))
    assert out_big.shape == (600, 1)
    assert jnp.allclose(out_big, _reference_forward_bf16(x_big, params),
                        atol=2e-5, rtol=2e-5)

    print("KERNEL_OK")
</pallas_src>

<mosaic_0001>
module attributes {stable_mosaic.version = 11 : i64} {
  func.func @discriminator_kernel(%arg0: i32, %arg1: memref<16x784xf32, #tpu.memory_space<vmem>>, %arg2: memref<784x512xbf16, #tpu.memory_space<vmem>>, %arg3: memref<1x512xf32, #tpu.memory_space<vmem>>, %arg4: memref<512x256xbf16, #tpu.memory_space<vmem>>, %arg5: memref<1x256xf32, #tpu.memory_space<vmem>>, %arg6: memref<256x128xbf16, #tpu.memory_space<vmem>>, %arg7: memref<1x128xf32, #tpu.memory_space<vmem>>, %arg8: memref<16x1xf32, #tpu.memory_space<vmem>>) attributes {dimension_semantics = [#tpu.dimension_semantics<parallel>], iteration_bounds = array<i64: 1>, scalar_prefetch = 0 : i64, scratch_operands = 0 : i64, tpu.core_type = #tpu.core_type<tc>, window_params = [{transform_indices = @transform_0, window_bounds = array<i64: 16, 784>}, {pipeline_mode = #tpu.pipeline_mode<synchronous>, transform_indices = @transform_1, window_bounds = array<i64: 784, 512>}, {pipeline_mode = #tpu.pipeline_mode<synchronous>, transform_indices = @transform_2, window_bounds = array<i64: 1, 512>}, {pipeline_mode = #tpu.pipeline_mode<synchronous>, transform_indices = @transform_3, window_bounds = array<i64: 512, 256>}, {pipeline_mode = #tpu.pipeline_mode<synchronous>, transform_indices = @transform_4, window_bounds = array<i64: 1, 256>}, {pipeline_mode = #tpu.pipeline_mode<synchronous>, transform_indices = @transform_5, window_bounds = array<i64: 256, 128>}, {pipeline_mode = #tpu.pipeline_mode<synchronous>, transform_indices = @transform_6, window_bounds = array<i64: 1, 128>}, {transform_indices = @transform_7, window_bounds = array<i64: 16, 1>}]} {
    %c0 = arith.constant 0 : index
    %c0_0 = arith.constant 0 : index
    %0 = vector.load %arg1[%c0, %c0_0] : memref<16x784xf32, #tpu.memory_space<vmem>>, vector<16x784xf32>
    %1 = arith.truncf %0 : vector<16x784xf32> to vector<16x784xbf16>
    %c0_1 = arith.constant 0 : index
    %c0_2 = arith.constant 0 : index
    %2 = vector.load %arg2[%c0_1, %c0_2] : memref<784x512xbf16, #tpu.memory_space<vmem>>, vector<784x512xbf16>
    %cst = arith.constant dense<0.000000e+00> : vector<16x512xf32>
    %3 = tpu.matmul %1, %2, %cst {dimension_numbers = #tpu.dot_dimension_numbers<[1], [0], [0], [1], [0, 0, 1, 1], [], []>} : vector<16x784xbf16>, vector<784x512xbf16>, vector<16x512xf32> -> vector<16x512xf32>
    %c0_3 = arith.constant 0 : index
    %c0_4 = arith.constant 0 : index
    %4 = vector.load %arg3[%c0_3, %c0_4] : memref<1x512xf32, #tpu.memory_space<vmem>>, vector<1x512xf32>
    %5 = vector.broadcast %4 : vector<1x512xf32> to vector<16x512xf32>
    %6 = arith.addf %3, %5 : vector<16x512xf32>
    %cst_5 = arith.constant 0.000000e+00 : f32
    %7 = vector.broadcast %cst_5 : f32 to vector<16x512xf32>
    %8 = arith.cmpf ogt, %6, %7 : vector<16x512xf32>
    %cst_6 = arith.constant 2.000000e-01 : f32
    %9 = vector.broadcast %cst_6 : f32 to vector<16x512xf32>
    %10 = arith.mulf %9, %6 : vector<16x512xf32>
    %11 = arith.select %8, %6, %10 : vector<16x512xi1>, vector<16x512xf32>
    %12 = arith.truncf %11 : vector<16x512xf32> to vector<16x512xbf16>
    %c0_7 = arith.constant 0 : index
    %c0_8 = arith.constant 0 : index
    %13 = vector.load %arg4[%c0_7, %c0_8] : memref<512x256xbf16, #tpu.memory_space<vmem>>, vector<512x256xbf16>
    %cst_9 = arith.constant dense<0.000000e+00> : vector<16x256xf32>
    %14 = tpu.matmul %12, %13, %cst_9 {dimension_numbers = #tpu.dot_dimension_numbers<[1], [0], [0], [1], [0, 0, 1, 1], [], []>} : vector<16x512xbf16>, vector<512x256xbf16>, vector<16x256xf32> -> vector<16x256xf32>
    %c0_10 = arith.constant 0 : index
    %c0_11 = arith.constant 0 : index
    %15 = vector.load %arg5[%c0_10, %c0_11] : memref<1x256xf32, #tpu.memory_space<vmem>>, vector<1x256xf32>
    %16 = vector.broadcast %15 : vector<1x256xf32> to vector<16x256xf32>
    %17 = arith.addf %14, %16 : vector<16x256xf32>
    %cst_12 = arith.constant 0.000000e+00 : f32
    %18 = vector.broadcast %cst_12 : f32 to vector<16x256xf32>
    %19 = arith.cmpf ogt, %17, %18 : vector<16x256xf32>
    %cst_13 = arith.constant 2.000000e-01 : f32
    %20 = vector.broadcast %cst_13 : f32 to vector<16x256xf32>
    %21 = arith.mulf %20, %17 : vector<16x256xf32>
    %22 = arith.select %19, %17, %21 : vector<16x256xi1>, vector<16x256xf32>
    %23 = arith.truncf %22 : vector<16x256xf32> to vector<16x256xbf16>
    %c0_14 = arith.constant 0 : index
    %c0_15 = arith.constant 0 : index
    %24 = vector.load %arg6[%c0_14, %c0_15] : memref<256x128xbf16, #tpu.memory_space<vmem>>, vector<256x128xbf16>
    %cst_16 = arith.constant dense<0.000000e+00> : vector<16x128xf32>
    %25 = tpu.matmul %23, %24, %cst_16 {dimension_numbers = #tpu.dot_dimension_numbers<[1], [0], [0], [1], [0, 0, 1, 1], [], []>} : vector<16x256xbf16>, vector<256x128xbf16>, vector<16x128xf32> -> vector<16x128xf32>
    %c0_17 = arith.constant 0 : index
    %c0_18 = arith.constant 0 : index
    %26 = vector.load %arg7[%c0_17, %c0_18] : memref<1x128xf32, #tpu.memory_space<vmem>>, vector<1x128xf32>
    %27 = vector.broadcast %26 : vector<1x128xf32> to vector<16x128xf32>
    %28 = arith.addf %25, %27 : vector<16x128xf32>
    %29 = vector.extract_strided_slice %28 {offsets = [0, 0], sizes = [16, 1], strides = [1, 1]} : vector<16x128xf32> to vector<16x1xf32>
    %30 = arith.negf %29 : vector<16x1xf32>
    %31 = math.exp %30 : vector<16x1xf32>
    %cst_19 = arith.constant 1.000000e+00 : f32
    %32 = vector.broadcast %cst_19 : f32 to vector<16x1xf32>
    %33 = arith.addf %32, %31 : vector<16x1xf32>
    %34 = arith.divf %32, %33 : vector<16x1xf32>
    %c0_20 = arith.constant 0 : index
    %c0_21 = arith.constant 0 : index
    %35 = vector.load %arg8[%c0_20, %c0_21] : memref<16x1xf32, #tpu.memory_space<vmem>>, vector<16x1xf32>
    tpu.vector_store %arg8[%c0_20, %c0_21], %34 {strides = array<i32>} : memref<16x1xf32, #tpu.memory_space<vmem>>, vector<16x1xf32>,
    return
  }
  func.func @transform_0(%arg0: i32) -> (i32, i32) {
    %c0_i32 = arith.constant 0 : i32
    %c0_i32_0 = arith.constant 0 : i32
    return %arg0, %c0_i32 : i32, i32
  }
  func.func @transform_1(%arg0: i32) -> (i32, i32) {
    %c0_i32 = arith.constant 0 : i32
    %c0_i32_0 = arith.constant 0 : i32
    %c0_i32_1 = arith.constant 0 : i32
    return %c0_i32, %c0_i32_0 : i32, i32
  }
  func.func @transform_2(%arg0: i32) -> (i32, i32) {
    %c0_i32 = arith.constant 0 : i32
    %c0_i32_0 = arith.constant 0 : i32
    %c0_i32_1 = arith.constant 0 : i32
    return %c0_i32, %c0_i32_0 : i32, i32
  }
  func.func @transform_3(%arg0: i32) -> (i32, i32) {
    %c0_i32 = arith.constant 0 : i32
    %c0_i32_0 = arith.constant 0 : i32
    %c0_i32_1 = arith.constant 0 : i32
    return %c0_i32, %c0_i32_0 : i32, i32
  }
  func.func @transform_4(%arg0: i32) -> (i32, i32) {
    %c0_i32 = arith.constant 0 : i32
    %c0_i32_0 = arith.constant 0 : i32
    %c0_i32_1 = arith.constant 0 : i32
    return %c0_i32, %c0_i32_0 : i32, i32
  }
  func.func @transform_5(%arg0: i32) -> (i32, i32) {
    %c0_i32 = arith.constant 0 : i32
    %c0_i32_0 = arith.constant 0 : i32
    %c0_i32_1 = arith.constant 0 : i32
    return %c0_i32, %c0_i32_0 : i32, i32
  }
  func.func @transform_6(%arg0: i32) -> (i32, i32) {
    %c0_i32 = arith.constant 0 : i32
    %c0_i32_0 = arith.constant 0 : i32
    %c0_i32_1 = arith.constant 0 : i32
    return %c0_i32, %c0_i32_0 : i32, i32
  }
  func.func @transform_7(%arg0: i32) -> (i32, i32) {
    %c0_i32 = arith.constant 0 : i32
    %c0_i32_0 = arith.constant 0 : i32
    return %arg0, %c0_i32 : i32, i32
  }
}

</mosaic_0001>

<llo_original>
// kernel: tpu_custom_call.1
$region0: #{tpu_custom_call.1}
  #allocation0 [shape = 'u32[]', space=smem, size = 0x4, offset = 0x4, fixed_abs, tag = 'smem constant byte address 0x4 - core index']
  #allocation1 [shape = 'u32[144,128]{1,0:T(1,128)}', space=vmem, size = 0x12000, scoped, tag = 'internal scratch']
  %s0 = inlined_call_operand.hbm [shape: f32[16,784], index: 0, kind: input, shape index: {}]
  %s1 = inlined_call_operand.hbm [shape: bf16[784,512], index: 1, kind: input, shape index: {}]
  %s2 = inlined_call_operand.vmem [shape: f32[1,512], index: 2, kind: input, shape index: {}]
  %s3 = inlined_call_operand.hbm [shape: bf16[512,256], index: 3, kind: input, shape index: {}]
  %s4 = inlined_call_operand.vmem [shape: f32[1,256], index: 4, kind: input, shape index: {}]
  %s5 = inlined_call_operand.hbm [shape: bf16[256,128], index: 5, kind: input, shape index: {}]
  %s6 = inlined_call_operand.vmem [shape: f32[1,128], index: 6, kind: input, shape index: {}]
  %s7 = inlined_call_operand.vmem [shape: f32[16,1], index: 7, kind: output, shape index: {}]
  %s8 = sld [smem:[#allocation0]]
  $region54: #{tpu_custom_call.1} parent=0
    _
  %s10 = ssub.s32 1, %s8
  %s11 = scalar_select 0, %s10, %s8
  $region1: #{tpu_custom_call.1} parent=0
    #allocation2 [shape = 'u8[57344]{0}', space=vmem, size = 0xe000, scoped, tag = 'input window, operand 0, single buffered']
    #allocation3 [shape = 's32[1]{0}', space=sflag, size = 0x4, scoped, tag = 'scoped memory for tpu_custom_call.1']
    #allocation4 [shape = 'u8[802816]{0}', space=vmem, size = 0xc4000, scoped, tag = 'input window, operand 1, single buffered']
    #allocation5 [shape = 's32[1]{0}', space=sflag, size = 0x4, scoped, tag = 'scoped memory for tpu_custom_call.1']
    #allocation6 [shape = 'u8[262144]{0}', space=vmem, size = 0x40000, scoped, tag = 'input window, operand 3, single buffered']
    #allocation7 [shape = 'u8[65536]{0}', space=vmem, size = 0x10000, scoped, tag = 'input window, operand 5, single buffered']
    #allocation8 [shape = 's32[1]{0}', space=sflag, size = 0x4, scoped, tag = 'scoped memory for tpu_custom_call.1']
    %12 = vsyncpa [#allocation3], 0
    %13 = vsyncpa [#allocation5], 0
    %14 = vsyncpa [#allocation8], 0
    // Predicated region
    $region2: #{tpu_custom_call.1} parent=1 // pred_check
      _
    $region3: #{tpu_custom_call.1} parent=1 // pred_check_branch
      %16 = sbr.rel (0) target = $region5
    $region4: #{tpu_custom_call.1} parent=1 // pred_region
      %s18 = ssub.s32 1792, 1792
      %19 = vsyncadd [#allocation3], %s18
      %s20 = sshll.u32 [#allocation2], 4
      %s21 = int_to_ptr.vmem [resolvable:$true] %s20
      %26 = dma.hbm_to_vmem [thread:$0]  %s0, 1792, %s21, [#allocation3], 896, 896, 56
    $region5: #{tpu_custom_call.1} parent=1 // pred_fallthru
      _
    // Predicated region
    $region6: #{tpu_custom_call.1} parent=1 // pred_check
      _
    $region7: #{tpu_custom_call.1} parent=1 // pred_check_branch
      %28 = sbr.rel (0) target = $region9
    $region8: #{tpu_custom_call.1} parent=1 // pred_region
      %s30 = ssub.s32 25088, 25088
      %31 = vsyncadd [#allocation5], %s30
      %s32 = sshll.u32 [#allocation4], 4
      %s33 = int_to_ptr.vmem [resolvable:$true] %s32
      %38 = dma.hbm_to_vmem [thread:$0]  %s1, 25088, %s33, [#allocation5], 256, 256, 16
    $region9: #{tpu_custom_call.1} parent=1 // pred_fallthru
      _
    // Predicated region
    $region10: #{tpu_custom_call.1} parent=1 // pred_check
      _
    $region11: #{tpu_custom_call.1} parent=1 // pred_check_branch
      %40 = sbr.rel (0) target = $region13
    $region12: #{tpu_custom_call.1} parent=1 // pred_region
      _
    $region13: #{tpu_custom_call.1} parent=1 // pred_fallthru
      _
    // Predicated region
    $region14: #{tpu_custom_call.1} parent=1 // pred_check
      _
    $region15: #{tpu_custom_call.1} parent=1 // pred_check_branch
      %42 = sbr.rel (0) target = $region17
    $region16: #{tpu_custom_call.1} parent=1 // pred_region
      %s44 = ssub.s32 8192, 8192
      %45 = vsyncadd [#allocation5], %s44
      %s46 = sshll.u32 [#allocation6], 4
      %s47 = int_to_ptr.vmem [resolvable:$true] %s46
      %52 = dma.hbm_to_vmem [thread:$0]  %s3, 8192, %s47, [#allocation5], 128, 128, 8
    $region17: #{tpu_custom_call.1} parent=1 // pred_fallthru
      _
    // Predicated region
    $region18: #{tpu_custom_call.1} parent=1 // pred_check
      _
    $region19: #{tpu_custom_call.1} parent=1 // pred_check_branch
      %54 = sbr.rel (0) target = $region21
    $region20: #{tpu_custom_call.1} parent=1 // pred_region
      _
    $region21: #{tpu_custom_call.1} parent=1 // pred_fallthru
      _
    // Predicated region
    $region22: #{tpu_custom_call.1} parent=1 // pred_check
      _
    $region23: #{tpu_custom_call.1} parent=1 // pred_check_branch
      %56 = sbr.rel (0) target = $region25
    $region24: #{tpu_custom_call.1} parent=1 // pred_region
      %s58 = ssub.s32 2048, 2048
      %59 = vsyncadd [#allocation8], %s58
      %s60 = sshll.u32 [#allocation7], 4
      %s61 = int_to_ptr.vmem [resolvable:$true] %s60
      %66 = dma.hbm_to_vmem [thread:$0]  %s5, 2048, %s61, [#allocation8], 64, 64, 4
    $region25: #{tpu_custom_call.1} parent=1 // pred_fallthru
      _
    // Predicated region
    $region26: #{tpu_custom_call.1} parent=1 // pred_check
      _
    $region27: #{tpu_custom_call.1} parent=1 // pred_check_branch
      %68 = sbr.rel (0) target = $region29
    $region28: #{tpu_custom_call.1} parent=1 // pred_region
      _
    $region29: #{tpu_custom_call.1} parent=1 // pred_fallthru
      _
    // Predicated region
    $region30: #{tpu_custom_call.1} parent=1 // pred_check
      _
    $region31: #{tpu_custom_call.1} parent=1 // pred_check_branch
      %70 = sbr.rel (0) target = $region33
    $region32: #{tpu_custom_call.1} parent=1 // pred_region
      %71 = dma.done [#allocation3], 1792
    $region33: #{tpu_custom_call.1} parent=1 // pred_fallthru
      _
    // Predicated region
    $region34: #{tpu_custom_call.1} parent=1 // pred_check
      _
    $region35: #{tpu_custom_call.1} parent=1 // pred_check_branch
      %73 = sbr.rel (0) target = $region37
    $region36: #{tpu_custom_call.1} parent=1 // pred_region
      %74 = dma.done [#allocation5], 25088
    $region37: #{tpu_custom_call.1} parent=1 // pred_fallthru
      _
    // Predicated region
    $region38: #{tpu_custom_call.1} parent=1 // pred_check
      _
    $region39: #{tpu_custom_call.1} parent=1 // pred_check_branch
      %76 = sbr.rel (0) target = $region41
    $region40: #{tpu_custom_call.1} parent=1 // pred_region
      %77 = dma.done [#allocation5], 8192
    $region41: #{tpu_custom_call.1} parent=1 // pred_fallthru
      _
    // Predicated region
    $region42: #{tpu_custom_call.1} parent=1 // pred_check
      _
    $region43: #{tpu_custom_call.1} parent=1 // pred_check_branch
      %79 = sbr.rel (0) target = $region45
    $region44: #{tpu_custom_call.1} parent=1 // pred_region
      %80 = dma.done [#allocation8], 2048
    $region45: #{tpu_custom_call.1} parent=1 // pred_fallthru
      _
    %v82 = vld [vmem:[#allocation2] sm:$0xff]
    %v83 = vld [vmem:[#allocation2 + $0x8] sm:$0xff]
    %v84 = vld [vmem:[#allocation2 + $0x10] sm:$0xff]
    %v85 = vld [vmem:[#allocation2 + $0x18] sm:$0xff]
    %v86 = vld [vmem:[#allocation2 + $0x20] sm:$0xff]
    %v87 = vld [vmem:[#allocation2 + $0x28] sm:$0xff]
    %v88 = vld [vmem:[#allocation2 + $0x30] sm:$0xff]
    %v89 = vld [vmem:[#allocation2 + $0x38] sm:$0xff]
    %v90 = vld [vmem:[#allocation2 + $0x40] sm:$0xff]
    %v91 = vld [vmem:[#allocation2 + $0x48] sm:$0xff]
    %v92 = vld [vmem:[#allocation2 + $0x50] sm:$0xff]
    %v93 = vld [vmem:[#allocation2 + $0x58] sm:$0xff]
    %v94 = vld [vmem:[#allocation2 + $0x60] sm:$0xff]
    %v95 = vld [vmem:[#allocation2 + $0x68] sm:$0xff]
    %v96 = vpack.c.bf16 %v89, %v82
    %v97 = vpack.c.bf16 %v90, %v83
    %v98 = vpack.c.bf16 %v91, %v84
    %v99 = vpack.c.bf16 %v92, %v85
    %v100 = vpack.c.bf16 %v93, %v86
    %v101 = vpack.c.bf16 %v94, %v87
    %v102 = vpack.c.bf16 %v95, %v88
    %v103 = vld [vmem:[#allocation4] sm:$0xff]
    %v104 = vld [vmem:[#allocation4 + $0x8] sm:$0xff]
    %v105 = vld [vmem:[#allocation4 + $0x10] sm:$0xff]
    %v106 = vld [vmem:[#allocation4 + $0x18] sm:$0xff]
    %v107 = vld [vmem:[#allocation4 + $0x20] sm:$0xff]
    %v108 = vld [vmem:[#allocation4 + $0x28] sm:$0xff]
    %v109 = vld [vmem:[#allocation4 + $0x30] sm:$0xff]
    %v110 = vld [vmem:[#allocation4 + $0x38] sm:$0xff]
    %v111 = vld [vmem:[#allocation4 + $0x40] sm:$0xff]
    %v112 = vld [vmem:[#allocation4 + $0x48] sm:$0xff]
    %v113 = vld [vmem:[#allocation4 + $0x50] sm:$0xff]
    %v114 = vld [vmem:[#allocation4 + $0x58] sm:$0xff]
    %v115 = vld [vmem:[#allocation4 + $0x60] sm:$0xff]
    %v116 = vld [vmem:[#allocation4 + $0x68] sm:$0xff]
    %v117 = vld [vmem:[#allocation4 + $0x70] sm:$0xff]
    %v118 = vld [vmem:[#allocation4 + $0x78] sm:$0xff]
    %v119 = vld [vmem:[#allocation4 + $0x80] sm:$0xff]
    %v120 = vld [vmem:[#allocation4 + $0x88] sm:$0xff]
    %v121 = vld [vmem:[#allocation4 + $0x90] sm:$0xff]
    %v122 = vld [vmem:[#allocation4 + $0x98] sm:$0xff]
    %v123 = vld [vmem:[#allocation4 + $0xa0] sm:$0xff]
    %v124 = vld [vmem:[#allocation4 + $0xa8] sm:$0xff]
    %v125 = vld [vmem:[#allocation4 + $0xb0] sm:$0xff]
    %v126 = vld [vmem:[#allocation4 + $0xb8] sm:$0xff]
    %v127 = vld [vmem:[#allocation4 + $0xc0] sm:$0xff]
    %v128 = vld [vmem:[#allocation4 + $0xc8] sm:$0xff]
    %v129 = vld [vmem:[#allocation4 + $0xd0] sm:$0xff]
    %v130 = vld [vmem:[#allocation4 + $0xd8] sm:$0xff]
    %v131 = vld [vmem:[#allocation4 + $0xe0] sm:$0xff]
    %v132 = vld [vmem:[#allocation4 + $0xe8] sm:$0xff]
    %v133 = vld [vmem:[#allocation4 + $0xf0] sm:$0xff]
    %v134 = vld [vmem:[#allocation4 + $0xf8] sm:$0xff]
    %v135 = vld [vmem:[#allocation4 + $0x100] sm:$0xff]
    %v136 = vld [vmem:[#allocation4 + $0x108] sm:$0xff]
    %v137 = vld [vmem:[#allocation4 + $0x110] sm:$0xff]
    %v138 = vld [vmem:[#allocation4 + $0x118] sm:$0xff]
    %v139 = vld [vmem:[#allocation4 + $0x120] sm:$0xff]
    %v140 = vld [vmem:[#allocation4 + $0x128] sm:$0xff]
    %v141 = vld [vmem:[#allocation4 + $0x130] sm:$0xff]
    %v142 = vld [vmem:[#allocation4 + $0x138] sm:$0xff]
    %v143 = vld [vmem:[#allocation4 + $0x140] sm:$0xff]
    %v144 = vld [vmem:[#allocation4 + $0x148] sm:$0xff]
    %v145 = vld [vmem:[#allocation4 + $0x150] sm:$0xff]
    %v146 = vld [vmem:[#allocation4 + $0x158] sm:$0xff]
    %v147 = vld [vmem:[#allocation4 + $0x160] sm:$0xff]
    %v148 = vld [vmem:[#allocation4 + $0x168] sm:$0xff]
    %v149 = vld [vmem:[#allocation4 + $0x170] sm:$0xff]
    %v150 = vld [vmem:[#allocation4 + $0x178] sm:$0xff]
    %v151 = vld [vmem:[#allocation4 + $0x180] sm:$0xff]
    %v152 = vld [vmem:[#allocation4 + $0x188] sm:$0xff]
    %v153 = vld [vmem:[#allocation4 + $0x190] sm:$0xff]
    %v154 = vld [vmem:[#allocation4 + $0x198] sm:$0xff]
    %v155 = vld [vmem:[#allocation4 + $0x1a0] sm:$0xff]
    %v156 = vld [vmem:[#allocation4 + $0x1a8] sm:$0xff]
    %v157 = vld [vmem:[#allocation4 + $0x1b0] sm:$0xff]
    %v158 = vld [vmem:[#allocation4 + $0x1b8] sm:$0xff]
    %v159 = vld [vmem:[#allocation4 + $0x1c0] sm:$0xff]
    %v160 = vld [vmem:[#allocation4 + $0x1c8] sm:$0xff]
    %v161 = vld [vmem:[#allocation4 + $0x1d0] sm:$0xff]
    %v162 = vld [vmem:[#allocation4 + $0x1d8] sm:$0xff]
    %v163 = vld [vmem:[#allocation4 + $0x1e0] sm:$0xff]
    %v164 = vld [vmem:[#allocation4 + $0x1e8] sm:$0xff]
    %v165 = vld [vmem:[#allocation4 + $0x1f0] sm:$0xff]
    %v166 = vld [vmem:[#allocation4 + $0x1f8] sm:$0xff]
    %v167 = vld [vmem:[#allocation4 + $0x200] sm:$0xff]
    %v168 = vld [vmem:[#allocation4 + $0x208] sm:$0xff]
    %v169 = vld [vmem:[#allocation4 + $0x210] sm:$0xff]
    %v170 = vld [vmem:[#allocation4 + $0x218] sm:$0xff]
    %v171 = vld [vmem:[#allocation4 + $0x220] sm:$0xff]
    %v172 = vld [vmem:[#allocation4 + $0x228] sm:$0xff]
    %v173 = vld [vmem:[#allocation4 + $0x230] sm:$0xff]
    %v174 = vld [vmem:[#allocation4 + $0x238] sm:$0xff]
    %v175 = vld [vmem:[#allocation4 + $0x240] sm:$0xff]
    %v176 = vld [vmem:[#allocation4 + $0x248] sm:$0xff]
    %v177 = vld [vmem:[#allocation4 + $0x250] sm:$0xff]
    %v178 = vld [vmem:[#allocation4 + $0x258] sm:$0xff]
    %v179 = vld [vmem:[#allocation4 + $0x260] sm:$0xff]
    %v180 = vld [vmem:[#allocation4 + $0x268] sm:$0xff]
    %v181 = vld [vmem:[#allocation4 + $0x270] sm:$0xff]
    %v182 = vld [vmem:[#allocation4 + $0x278] sm:$0xff]
    %v183 = vld [vmem:[#allocation4 + $0x280] sm:$0xff]
    %v184 = vld [vmem:[#allocation4 + $0x288] sm:$0xff]
    %v185 = vld [vmem:[#allocation4 + $0x290] sm:$0xff]
    %v186 = vld [vmem:[#allocation4 + $0x298] sm:$0xff]
    %v187 = vld [vmem:[#allocation4 + $0x2a0] sm:$0xff]
    %v188 = vld [vmem:[#allocation4 + $0x2a8] sm:$0xff]
    %v189 = vld [vmem:[#allocation4 + $0x2b0] sm:$0xff]
    %v190 = vld [vmem:[#allocation4 + $0x2b8] sm:$0xff]
    %v191 = vld [vmem:[#allocation4 + $0x2c0] sm:$0xff]
    %v192 = vld [vmem:[#allocation4 + $0x2c8] sm:$0xff]
    %v193 = vld [vmem:[#allocation4 + $0x2d0] sm:$0xff]
    %v194 = vld [vmem:[#allocation4 + $0x2d8] sm:$0xff]
    %v195 = vld [vmem:[#allocation4 + $0x2e0] sm:$0xff]
    %v196 = vld [vmem:[#allocation4 + $0x2e8] sm:$0xff]
    %v197 = vld [vmem:[#allocation4 + $0x2f0] sm:$0xff]
    %v198 = vld [vmem:[#allocation4 + $0x2f8] sm:$0xff]
    %v199 = vld [vmem:[#allocation4 + $0x300] sm:$0xff]
    %v200 = vld [vmem:[#allocation4 + $0x308] sm:$0xff]
    %v201 = vld [vmem:[#allocation4 + $0x310] sm:$0xff]
    %v202 = vld [vmem:[#allocation4 + $0x318] sm:$0xff]
    %v203 = vld [vmem:[#allocation4 + $0x320] sm:$0xff]
    %v204 = vld [vmem:[#allocation4 + $0x328] sm:$0xff]
    %v205 = vld [vmem:[#allocation4 + $0x330] sm:$0xff]
    %v206 = vld [vmem:[#allocation4 + $0x338] sm:$0xff]
    %v207 = vld [vmem:[#allocation4 + $0x340] sm:$0xff]
    %v208 = vld [vmem:[#allocation4 + $0x348] sm:$0xff]
    %v209 = vld [vmem:[#allocation4 + $0x350] sm:$0xff]
    %v210 = vld [vmem:[#allocation4 + $0x358] sm:$0xff]
    %v211 = vld [vmem:[#allocation4 + $0x360] sm:$0xff]
    %v212 = vld [vmem:[#allocation4 + $0x368] sm:$0xff]
    %v213 = vld [vmem:[#allocation4 + $0x370] sm:$0xff]
    %v214 = vld [vmem:[#allocation4 + $0x378] sm:$0xff]
    %v215 = vld [vmem:[#allocation4 + $0x380] sm:$0xff]
    %v216 = vld [vmem:[#allocation4 + $0x388] sm:$0xff]
    %v217 = vld [vmem:[#allocation4 + $0x390] sm:$0xff]
    %v218 = vld [vmem:[#allocation4 + $0x398] sm:$0xff]
    %v219 = vld [vmem:[#allocation4 + $0x3a0] sm:$0xff]
    %v220 = vld [vmem:[#allocation4 + $0x3a8] sm:$0xff]
    %v221 = vld [vmem:[#allocation4 + $0x3b0] sm:$0xff]
    %v222 = vld [vmem:[#allocation4 + $0x3b8] sm:$0xff]
    %v223 = vld [vmem:[#allocation4 + $0x3c0] sm:$0xff]
    %v224 = vld [vmem:[#allocation4 + $0x3c8] sm:$0xff]
    %v225 = vld [vmem:[#allocation4 + $0x3d0] sm:$0xff]
    %v226 = vld [vmem:[#allocation4 + $0x3d8] sm:$0xff]
    %v227 = vld [vmem:[#allocation4 + $0x3e0] sm:$0xff]
    %v228 = vld [vmem:[#allocation4 + $0x3e8] sm:$0xff]
    %v229 = vld [vmem:[#allocation4 + $0x3f0] sm:$0xff]
    %v230 = vld [vmem:[#allocation4 + $0x3f8] sm:$0xff]
    %v231 = vld [vmem:[#allocation4 + $0x400] sm:$0xff]
    %v232 = vld [vmem:[#allocation4 + $0x408] sm:$0xff]
    %v233 = vld [vmem:[#allocation4 + $0x410] sm:$0xff]
    %v234 = vld [vmem:[#allocation4 + $0x418] sm:$0xff]
    %v235 = vld [vmem:[#allocation4 + $0x420] sm:$0xff]
    %v236 = vld [vmem:[#allocation4 + $0x428] sm:$0xff]
    %v237 = vld [vmem:[#allocation4 + $0x430] sm:$0xff]
    %v238 = vld [vmem:[#allocation4 + $0x438] sm:$0xff]
    %v239 = vld [vmem:[#allocation4 + $0x440] sm:$0xff]
    %v240 = vld [vmem:[#allocation4 + $0x448] sm:$0xff]
    %v241 = vld [vmem:[#allocation4 + $0x450] sm:$0xff]
    %v242 = vld [vmem:[#allocation4 + $0x458] sm:$0xff]
    %v243 = vld [vmem:[#allocation4 + $0x460] sm:$0xff]
    %v244 = vld [vmem:[#allocation4 + $0x468] sm:$0xff]
    %v245 = vld [vmem:[#allocation4 + $0x470] sm:$0xff]
    %v246 = vld [vmem:[#allocation4 + $0x478] sm:$0xff]
    %v247 = vld [vmem:[#allocation4 + $0x480] sm:$0xff]
    %v248 = vld [vmem:[#allocation4 + $0x488] sm:$0xff]
    %v249 = vld [vmem:[#allocation4 + $0x490] sm:$0xff]
    %v250 = vld [vmem:[#allocation4 + $0x498] sm:$0xff]
    %v251 = vld [vmem:[#allocation4 + $0x4a0] sm:$0xff]
    %v252 = vld [vmem:[#allocation4 + $0x4a8] sm:$0xff]
    %v253 = vld [vmem:[#allocation4 + $0x4b0] sm:$0xff]
    %v254 = vld [vmem:[#allocation4 + $0x4b8] sm:$0xff]
    %v255 = vld [vmem:[#allocation4 + $0x4c0] sm:$0xff]
    %v256 = vld [vmem:[#allocation4 + $0x4c8] sm:$0xff]
    %v257 = vld [vmem:[#allocation4 + $0x4d0] sm:$0xff]
    %v258 = vld [vmem:[#allocation4 + $0x4d8] sm:$0xff]
    %v259 = vld [vmem:[#allocation4 + $0x4e0] sm:$0xff]
    %v260 = vld [vmem:[#allocation4 + $0x4e8] sm:$0xff]
    %v261 = vld [vmem:[#allocation4 + $0x4f0] sm:$0xff]
    %v262 = vld [vmem:[#allocation4 + $0x4f8] sm:$0xff]
    %v263 = vld [vmem:[#allocation4 + $0x500] sm:$0xff]
    %v264 = vld [vmem:[#allocation4 + $0x508] sm:$0xff]
    %v265 = vld [vmem:[#allocation4 + $0x510] sm:$0xff]
    %v266 = vld [vmem:[#allocation4 + $0x518] sm:$0xff]
    %v267 = vld [vmem:[#allocation4 + $0x520] sm:$0xff]
    %v268 = vld [vmem:[#allocation4 + $0x528] sm:$0xff]
    %v269 = vld [vmem:[#allocation4 + $0x530] sm:$0xff]
    %v270 = vld [vmem:[#allocation4 + $0x538] sm:$0xff]
    %v271 = vld [vmem:[#allocation4 + $0x540] sm:$0xff]
    %v272 = vld [vmem:[#allocation4 + $0x548] sm:$0xff]
    %v273 = vld [vmem:[#allocation4 + $0x550] sm:$0xff]
    %v274 = vld [vmem:[#allocation4 + $0x558] sm:$0xff]
    %v275 = vld [vmem:[#allocation4 + $0x560] sm:$0xff]
    %v276 = vld [vmem:[#allocation4 + $0x568] sm:$0xff]
    %v277 = vld [vmem:[#allocation4 + $0x570] sm:$0xff]
    %v278 = vld [vmem:[#allocation4 + $0x578] sm:$0xff]
    %v279 = vld [vmem:[#allocation4 + $0x580] sm:$0xff]
    %v280 = vld [vmem:[#allocation4 + $0x588] sm:$0xff]
    %v281 = vld [vmem:[#allocation4 + $0x590] sm:$0xff]
    %v282 = vld [vmem:[#allocation4 + $0x598] sm:$0xff]
    %v283 = vld [vmem:[#allocation4 + $0x5a0] sm:$0xff]
    %v284 = vld [vmem:[#allocation4 + $0x5a8] sm:$0xff]
    %v285 = vld [vmem:[#allocation4 + $0x5b0] sm:$0xff]
    %v286 = vld [vmem:[#allocation4 + $0x5b8] sm:$0xff]
    %v287 = vld [vmem:[#allocation4 + $0x5c0] sm:$0xff]
    %v288 = vld [vmem:[#allocation4 + $0x5c8] sm:$0xff]
    %v289 = vld [vmem:[#allocation4 + $0x5d0] sm:$0xff]
    %v290 = vld [vmem:[#allocation4 + $0x5d8] sm:$0xff]
    %v291 = vld [vmem:[#allocation4 + $0x5e0] sm:$0xff]
    %v292 = vld [vmem:[#allocation4 + $0x5e8] sm:$0xff]
    %v293 = vld [vmem:[#allocation4 + $0x5f0] sm:$0xff]
    %v294 = vld [vmem:[#allocation4 + $0x5f8] sm:$0xff]
    %v295 = vld [vmem:[#allocation4 + $0x600] sm:$0xff]
    %v296 = vld [vmem:[#allocation4 + $0x608] sm:$0xff]
    %v297 = vld [vmem:[#allocation4 + $0x610] sm:$0xff]
    %v298 = vld [vmem:[#allocation4 + $0x618] sm:$0xff]
    %v299 = vld [vmem:[%s2] sm:$0xf]
    %v301 = vlaneseq
    %v302 = vshrl.u32 %v301, 7
    %v303 = vsub.s32 0, %v302
    %v304 = vrot.slane %v299, %v303
    %v305 = vlaneseq
    %v306 = vshrl.u32 %v305, 7
    %v307 = vsub.s32 1, %v306
    %v308 = vrot.slane %v299, %v307
    %v309 = vlaneseq
    %v310 = vshrl.u32 %v309, 7
    %v311 = vsub.s32 2, %v310
    %v312 = vrot.slane %v299, %v311
    %v313 = vlaneseq
    %v314 = vshrl.u32 %v313, 7
    %v315 = vsub.s32 3, %v314
    %v316 = vrot.slane %v299, %v315
    %v517 = vunpack.c.l.b16 %v103
    %v518 = vunpack.c.h.b16 %v103
    %v519 = vunpack.c.l.b16 %v104
    %v520 = vunpack.c.h.b16 %v104
    %v521 = vunpack.c.l.b16 %v105
    %v522 = vunpack.c.h.b16 %v105
    %v523 = vunpack.c.l.b16 %v106
    %v524 = vunpack.c.h.b16 %v106
    %v525 = vunpack.c.l.b16 %v107
    %v526 = vunpack.c.h.b16 %v107
    %v527 = vunpack.c.l.b16 %v108
    %v528 = vunpack.c.h.b16 %v108
    %v529 = vunpack.c.l.b16 %v109
    %v530 = vunpack.c.h.b16 %v109
    %v531 = vunpack.c.l.b16 %v110
    %v532 = vunpack.c.h.b16 %v110
    %v533 = vunpack.c.l.b16 %v111
    %v534 = vunpack.c.h.b16 %v111
    %v535 = vunpack.c.l.b16 %v112
    %v536 = vunpack.c.h.b16 %v112
    %v537 = vunpack.c.l.b16 %v113
    %v538 = vunpack.c.h.b16 %v113
    %v539 = vunpack.c.l.b16 %v114
    %v540 = vunpack.c.h.b16 %v114
    %v541 = vunpack.c.l.b16 %v115
    %v542 = vunpack.c.h.b16 %v115
    %v543 = vunpack.c.l.b16 %v116
    %v544 = vunpack.c.h.b16 %v116
    %v545 = vunpack.c.l.b16 %v117
    %v546 = vunpack.c.h.b16 %v117
    %v547 = vunpack.c.l.b16 %v118
    %v548 = vunpack.c.h.b16 %v118
    %v549 = vunpack.c.l.b16 %v119
    %v550 = vunpack.c.h.b16 %v119
    %v551 = vunpack.c.l.b16 %v120
    %v552 = vunpack.c.h.b16 %v120
    %v553 = vunpack.c.l.b16 %v121
    %v554 = vunpack.c.h.b16 %v121
    %v555 = vunpack.c.l.b16 %v122
    %v556 = vunpack.c.h.b16 %v122
    %v557 = vunpack.c.l.b16 %v123
    %v558 = vunpack.c.h.b16 %v123
    %v559 = vunpack.c.l.b16 %v124
    %v560 = vunpack.c.h.b16 %v124
    %v561 = vunpack.c.l.b16 %v125
    %v562 = vunpack.c.h.b16 %v125
    %v563 = vunpack.c.l.b16 %v126
    %v564 = vunpack.c.h.b16 %v126
    %v565 = vunpack.c.l.b16 %v127
    %v566 = vunpack.c.h.b16 %v127
    %v567 = vunpack.c.l.b16 %v128
    %v568 = vunpack.c.h.b16 %v128
    %v569 = vunpack.c.l.b16 %v129
    %v570 = vunpack.c.h.b16 %v129
    %v571 = vunpack.c.l.b16 %v130
    %v572 = vunpack.c.h.b16 %v130
    %v573 = vunpack.c.l.b16 %v131
    %v574 = vunpack.c.h.b16 %v131
    %v575 = vunpack.c.l.b16 %v132
    %v576 = vunpack.c.h.b16 %v132
    %v577 = vunpack.c.l.b16 %v133
    %v578 = vunpack.c.h.b16 %v133
    %v579 = vunpack.c.l.b16 %v134
    %v580 = vunpack.c.h.b16 %v134
    %v581 = vunpack.c.l.b16 %v135
    %v582 = vunpack.c.h.b16 %v135
    %v583 = vunpack.c.l.b16 %v136
    %v584 = vunpack.c.h.b16 %v136
    %v585 = vunpack.c.l.b16 %v137
    %v586 = vunpack.c.h.b16 %v137
    %v587 = vunpack.c.l.b16 %v138
    %v588 = vunpack.c.h.b16 %v138
    %v589 = vunpack.c.l.b16 %v139
    %v590 = vunpack.c.h.b16 %v139
    %v591 = vunpack.c.l.b16 %v140
    %v592 = vunpack.c.h.b16 %v140
    %v593 = vunpack.c.l.b16 %v141
    %v594 = vunpack.c.h.b16 %v141
    %v595 = vunpack.c.l.b16 %v142
    %v596 = vunpack.c.h.b16 %v142
    %v597 = vunpack.c.l.b16 %v143
    %v598 = vunpack.c.h.b16 %v143
    %v599 = vunpack.c.l.b16 %v144
    %v600 = vunpack.c.h.b16 %v144
    %v601 = vunpack.c.l.b16 %v145
    %v602 = vunpack.c.h.b16 %v145
    %v603 = vunpack.c.l.b16 %v146
    %v604 = vunpack.c.h.b16 %v146
    %v605 = vunpack.c.l.b16 %v147
    %v606 = vunpack.c.h.b16 %v147
    %v607 = vunpack.c.l.b16 %v148
    %v608 = vunpack.c.h.b16 %v148
    %v609 = vunpack.c.l.b16 %v149
    %v610 = vunpack.c.h.b16 %v149
    %v611 = vunpack.c.l.b16 %v150
    %v612 = vunpack.c.h.b16 %v150
    %v613 = vunpack.c.l.b16 %v151
    %v614 = vunpack.c.h.b16 %v151
    %v615 = vunpack.c.l.b16 %v152
    %v616 = vunpack.c.h.b16 %v152
    %v617 = vunpack.c.l.b16 %v153
    %v618 = vunpack.c.h.b16 %v153
    %v619 = vunpack.c.l.b16 %v154
    %v620 = vunpack.c.h.b16 %v154
    %v621 = vunpack.c.l.b16 %v155
    %v622 = vunpack.c.h.b16 %v155
    %v623 = vunpack.c.l.b16 %v156
    %v624 = vunpack.c.h.b16 %v156
    %v625 = vunpack.c.l.b16 %v157
    %v626 = vunpack.c.h.b16 %v157
    %v627 = vunpack.c.l.b16 %v158
    %v628 = vunpack.c.h.b16 %v158
    %v629 = vunpack.c.l.b16 %v159
    %v630 = vunpack.c.h.b16 %v159
    %v631 = vunpack.c.l.b16 %v160
    %v632 = vunpack.c.h.b16 %v160
    %v633 = vunpack.c.l.b16 %v161
    %v634 = vunpack.c.h.b16 %v161
    %v635 = vunpack.c.l.b16 %v162
    %v636 = vunpack.c.h.b16 %v162
    %v637 = vunpack.c.l.b16 %v163
    %v638 = vunpack.c.h.b16 %v163
    %v639 = vunpack.c.l.b16 %v164
    %v640 = vunpack.c.h.b16 %v164
    %v641 = vunpack.c.l.b16 %v165
    %v642 = vunpack.c.h.b16 %v165
    %v643 = vunpack.c.l.b16 %v166
    %v644 = vunpack.c.h.b16 %v166
    %v645 = vunpack.c.l.b16 %v167
    %v646 = vunpack.c.h.b16 %v167
    %v647 = vunpack.c.l.b16 %v168
    %v648 = vunpack.c.h.b16 %v168
    %v649 = vunpack.c.l.b16 %v169
    %v650 = vunpack.c.h.b16 %v169
    %v651 = vunpack.c.l.b16 %v170
    %v652 = vunpack.c.h.b16 %v170
    %v653 = vunpack.c.l.b16 %v171
    %v654 = vunpack.c.h.b16 %v171
    %v655 = vunpack.c.l.b16 %v172
    %v656 = vunpack.c.h.b16 %v172
    %v657 = vunpack.c.l.b16 %v173
    %v658 = vunpack.c.h.b16 %v173
    %v659 = vunpack.c.l.b16 %v174
    %v660 = vunpack.c.h.b16 %v174
    %v661 = vunpack.c.l.b16 %v175
    %v662 = vunpack.c.h.b16 %v175
    %v663 = vunpack.c.l.b16 %v176
    %v664 = vunpack.c.h.b16 %v176
    %v665 = vunpack.c.l.b16 %v177
    %v666 = vunpack.c.h.b16 %v177
    %v667 = vunpack.c.l.b16 %v178
    %v668 = vunpack.c.h.b16 %v178
    %v669 = vunpack.c.l.b16 %v179
    %v670 = vunpack.c.h.b16 %v179
    %v671 = vunpack.c.l.b16 %v180
    %v672 = vunpack.c.h.b16 %v180
    %v673 = vunpack.c.l.b16 %v181
    %v674 = vunpack.c.h.b16 %v181
    %v675 = vunpack.c.l.b16 %v182
    %v676 = vunpack.c.h.b16 %v182
    %v677 = vunpack.c.l.b16 %v183
    %v678 = vunpack.c.h.b16 %v183
    %v679 = vunpack.c.l.b16 %v184
    %v680 = vunpack.c.h.b16 %v184
    %v681 = vunpack.c.l.b16 %v185
    %v682 = vunpack.c.h.b16 %v185
    %v683 = vunpack.c.l.b16 %v186
    %v684 = vunpack.c.h.b16 %v186
    %v685 = vunpack.c.l.b16 %v187
    %v686 = vunpack.c.h.b16 %v187
    %v687 = vunpack.c.l.b16 %v188
    %v688 = vunpack.c.h.b16 %v188
    %v689 = vunpack.c.l.b16 %v189
    %v690 = vunpack.c.h.b16 %v189
    %v691 = vunpack.c.l.b16 %v190
    %v692 = vunpack.c.h.b16 %v190
    %v693 = vunpack.c.l.b16 %v191
    %v694 = vunpack.c.h.b16 %v191
    %v695 = vunpack.c.l.b16 %v192
    %v696 = vunpack.c.h.b16 %v192
    %v697 = vunpack.c.l.b16 %v193
    %v698 = vunpack.c.h.b16 %v193
    %v699 = vunpack.c.l.b16 %v194
    %v700 = vunpack.c.h.b16 %v194
    %v701 = vunpack.c.l.b16 %v195
    %v702 = vunpack.c.h.b16 %v195
    %v703 = vunpack.c.l.b16 %v196
    %v704 = vunpack.c.h.b16 %v196
    %v705 = vunpack.c.l.b16 %v197
    %v706 = vunpack.c.h.b16 %v197
    %v707 = vunpack.c.l.b16 %v198
    %v708 = vunpack.c.h.b16 %v198
    %v709 = vunpack.c.l.b16 %v199
    %v710 = vunpack.c.h.b16 %v199
    %v711 = vunpack.c.l.b16 %v200
    %v712 = vunpack.c.h.b16 %v200
    %v713 = vunpack.c.l.b16 %v201
    %v714 = vunpack.c.h.b16 %v201
    %v715 = vunpack.c.l.b16 %v202
    %v716 = vunpack.c.h.b16 %v202
    %v717 = vunpack.c.l.b16 %v203
    %v718 = vunpack.c.h.b16 %v203
    %v719 = vunpack.c.l.b16 %v204
    %v720 = vunpack.c.h.b16 %v204
    %v721 = vunpack.c.l.b16 %v205
    %v722 = vunpack.c.h.b16 %v205
    %v723 = vunpack.c.l.b16 %v206
    %v724 = vunpack.c.h.b16 %v206
    %v725 = vunpack.c.l.b16 %v207
    %v726 = vunpack.c.h.b16 %v207
    %v727 = vunpack.c.l.b16 %v208
    %v728 = vunpack.c.h.b16 %v208
    %v729 = vunpack.c.l.b16 %v209
    %v730 = vunpack.c.h.b16 %v209
    %v731 = vunpack.c.l.b16 %v210
    %v732 = vunpack.c.h.b16 %v210
    %v733 = vunpack.c.l.b16 %v211
    %v734 = vunpack.c.h.b16 %v211
    %v735 = vunpack.c.l.b16 %v212
    %v736 = vunpack.c.h.b16 %v212
    %v737 = vunpack.c.l.b16 %v213
    %v738 = vunpack.c.h.b16 %v213
    %v739 = vunpack.c.l.b16 %v214
    %v740 = vunpack.c.h.b16 %v214
    %v741 = vunpack.c.l.b16 %v215
    %v742 = vunpack.c.h.b16 %v215
    %v743 = vunpack.c.l.b16 %v216
    %v744 = vunpack.c.h.b16 %v216
    %v745 = vunpack.c.l.b16 %v217
    %v746 = vunpack.c.h.b16 %v217
    %v747 = vunpack.c.l.b16 %v218
    %v748 = vunpack.c.h.b16 %v218
    %v749 = vunpack.c.l.b16 %v219
    %v750 = vunpack.c.h.b16 %v219
    %v751 = vunpack.c.l.b16 %v220
    %v752 = vunpack.c.h.b16 %v220
    %v753 = vunpack.c.l.b16 %v221
    %v754 = vunpack.c.h.b16 %v221
    %v755 = vunpack.c.l.b16 %v222
    %v756 = vunpack.c.h.b16 %v222
    %v757 = vunpack.c.l.b16 %v223
    %v758 = vunpack.c.h.b16 %v223
    %v759 = vunpack.c.l.b16 %v224
    %v760 = vunpack.c.h.b16 %v224
    %v761 = vunpack.c.l.b16 %v225
    %v762 = vunpack.c.h.b16 %v225
    %v763 = vunpack.c.l.b16 %v226
    %v764 = vunpack.c.h.b16 %v226
    %v765 = vunpack.c.l.b16 %v227
    %v766 = vunpack.c.h.b16 %v227
    %v767 = vunpack.c.l.b16 %v228
    %v768 = vunpack.c.h.b16 %v228
    %v769 = vunpack.c.l.b16 %v229
    %v770 = vunpack.c.h.b16 %v229
    %v771 = vunpack.c.l.b16 %v230
    %v772 = vunpack.c.h.b16 %v230
    %v773 = vunpack.c.l.b16 %v231
    %v774 = vunpack.c.h.b16 %v231
    %v775 = vunpack.c.l.b16 %v232
    %v776 = vunpack.c.h.b16 %v232
    %v777 = vunpack.c.l.b16 %v233
    %v778 = vunpack.c.h.b16 %v233
    %v779 = vunpack.c.l.b16 %v234
    %v780 = vunpack.c.h.b16 %v234
    %v781 = vunpack.c.l.b16 %v235
    %v782 = vunpack.c.h.b16 %v235
    %v783 = vunpack.c.l.b16 %v236
    %v784 = vunpack.c.h.b16 %v236
    %v785 = vunpack.c.l.b16 %v237
    %v786 = vunpack.c.h.b16 %v237
    %v787 = vunpack.c.l.b16 %v238
    %v788 = vunpack.c.h.b16 %v238
    %v789 = vunpack.c.l.b16 %v239
    %v790 = vunpack.c.h.b16 %v239
    %v791 = vunpack.c.l.b16 %v240
    %v792 = vunpack.c.h.b16 %v240
    %v793 = vunpack.c.l.b16 %v241
    %v794 = vunpack.c.h.b16 %v241
    %v795 = vunpack.c.l.b16 %v242
    %v796 = vunpack.c.h.b16 %v242
    %v797 = vunpack.c.l.b16 %v243
    %v798 = vunpack.c.h.b16 %v243
    %v799 = vunpack.c.l.b16 %v244
    %v800 = vunpack.c.h.b16 %v244
    %v801 = vunpack.c.l.b16 %v245
    %v802 = vunpack.c.h.b16 %v245
    %v803 = vunpack.c.l.b16 %v246
    %v804 = vunpack.c.h.b16 %v246
    %v805 = vunpack.c.l.b16 %v247
    %v806 = vunpack.c.h.b16 %v247
    %v807 = vunpack.c.l.b16 %v248
    %v808 = vunpack.c.h.b16 %v248
    %v809 = vunpack.c.l.b16 %v249
    %v810 = vunpack.c.h.b16 %v249
    %v811 = vunpack.c.l.b16 %v250
    %v812 = vunpack.c.h.b16 %v250
    %v813 = vunpack.c.l.b16 %v251
    %v814 = vunpack.c.h.b16 %v251
    %v815 = vunpack.c.l.b16 %v252
    %v816 = vunpack.c.h.b16 %v252
    %v817 = vunpack.c.l.b16 %v253
    %v818 = vunpack.c.h.b16 %v253
    %v819 = vunpack.c.l.b16 %v254
    %v820 = vunpack.c.h.b16 %v254
    %v821 = vunpack.c.l.b16 %v255
    %v822 = vunpack.c.h.b16 %v255
    %v823 = vunpack.c.l.b16 %v256
    %v824 = vunpack.c.h.b16 %v256
    %v825 = vunpack.c.l.b16 %v257
    %v826 = vunpack.c.h.b16 %v257
    %v827 = vunpack.c.l.b16 %v258
    %v828 = vunpack.c.h.b16 %v258
    %v829 = vunpack.c.l.b16 %v259
    %v830 = vunpack.c.h.b16 %v259
    %v831 = vunpack.c.l.b16 %v260
    %v832 = vunpack.c.h.b16 %v260
    %v833 = vunpack.c.l.b16 %v261
    %v834 = vunpack.c.h.b16 %v261
    %v835 = vunpack.c.l.b16 %v262
    %v836 = vunpack.c.h.b16 %v262
    %v837 = vunpack.c.l.b16 %v263
    %v838 = vunpack.c.h.b16 %v263
    %v839 = vunpack.c.l.b16 %v264
    %v840 = vunpack.c.h.b16 %v264
    %v841 = vunpack.c.l.b16 %v265
    %v842 = vunpack.c.h.b16 %v265
    %v843 = vunpack.c.l.b16 %v266
    %v844 = vunpack.c.h.b16 %v266
    %v845 = vunpack.c.l.b16 %v267
    %v846 = vunpack.c.h.b16 %v267
    %v847 = vunpack.c.l.b16 %v268
    %v848 = vunpack.c.h.b16 %v268
    %v849 = vunpack.c.l.b16 %v269
    %v850 = vunpack.c.h.b16 %v269
    %v851 = vunpack.c.l.b16 %v270
    %v852 = vunpack.c.h.b16 %v270
    %v853 = vunpack.c.l.b16 %v271
    %v854 = vunpack.c.h.b16 %v271
    %v855 = vunpack.c.l.b16 %v272
    %v856 = vunpack.c.h.b16 %v272
    %v857 = vunpack.c.l.b16 %v273
    %v858 = vunpack.c.h.b16 %v273
    %v859 = vunpack.c.l.b16 %v274
    %v860 = vunpack.c.h.b16 %v274
    %v861 = vunpack.c.l.b16 %v275
    %v862 = vunpack.c.h.b16 %v275
    %v863 = vunpack.c.l.b16 %v276
    %v864 = vunpack.c.h.b16 %v276
    %v865 = vunpack.c.l.b16 %v277
    %v866 = vunpack.c.h.b16 %v277
    %v867 = vunpack.c.l.b16 %v278
    %v868 = vunpack.c.h.b16 %v278
    %v869 = vunpack.c.l.b16 %v279
    %v870 = vunpack.c.h.b16 %v279
    %v871 = vunpack.c.l.b16 %v280
    %v872 = vunpack.c.h.b16 %v280
    %v873 = vunpack.c.l.b16 %v281
    %v874 = vunpack.c.h.b16 %v281
    %v875 = vunpack.c.l.b16 %v282
    %v876 = vunpack.c.h.b16 %v282
    %v877 = vunpack.c.l.b16 %v283
    %v878 = vunpack.c.h.b16 %v283
    %v879 = vunpack.c.l.b16 %v284
    %v880 = vunpack.c.h.b16 %v284
    %v881 = vunpack.c.l.b16 %v285
    %v882 = vunpack.c.h.b16 %v285
    %v883 = vunpack.c.l.b16 %v286
    %v884 = vunpack.c.h.b16 %v286
    %v885 = vunpack.c.l.b16 %v287
    %v886 = vunpack.c.h.b16 %v287
    %v887 = vunpack.c.l.b16 %v288
    %v888 = vunpack.c.h.b16 %v288
    %v889 = vunpack.c.l.b16 %v289
    %v890 = vunpack.c.h.b16 %v289
    %v891 = vunpack.c.l.b16 %v290
    %v892 = vunpack.c.h.b16 %v290
    %v893 = vunpack.c.l.b16 %v291
    %v894 = vunpack.c.h.b16 %v291
    %v895 = vunpack.c.l.b16 %v292
    %v896 = vunpack.c.h.b16 %v292
    %v897 = vunpack.c.l.b16 %v293
    %v898 = vunpack.c.h.b16 %v293
    %v899 = vunpack.c.l.b16 %v294
    %v900 = vunpack.c.h.b16 %v294
    %v901 = vunpack.c.l.b16 %v295
    %v902 = vunpack.c.h.b16 %v295
    %v903 = vunpack.c.l.b16 %v296
    %v904 = vunpack.c.h.b16 %v296
    %v905 = vunpack.c.l.b16 %v297
    %v906 = vunpack.c.h.b16 %v297
    %v907 = vunpack.c.l.b16 %v298
    %v908 = vunpack.c.h.b16 %v298
    %v909 = vpack.c.b16 %v521, %v517
    %v910 = vpack.c.b16 %v522, %v518
    %v911 = vpack.c.b16 %v523, %v519
    %v912 = vpack.c.b16 %v524, %v520
    %v913 = vpack.c.b16 %v529, %v525
    %v914 = vpack.c.b16 %v530, %v526
    %v915 = vpack.c.b16 %v531, %v527
    %v916 = vpack.c.b16 %v532, %v528
    %v917 = vpack.c.b16 %v537, %v533
    %v918 = vpack.c.b16 %v538, %v534
    %v919 = vpack.c.b16 %v539, %v535
    %v920 = vpack.c.b16 %v540, %v536
    %v921 = vpack.c.b16 %v545, %v541
    %v922 = vpack.c.b16 %v546, %v542
    %v923 = vpack.c.b16 %v547, %v543
    %v924 = vpack.c.b16 %v548, %v544
    %v925 = vpack.c.b16 %v553, %v549
    %v926 = vpack.c.b16 %v554, %v550
    %v927 = vpack.c.b16 %v555, %v551
    %v928 = vpack.c.b16 %v556, %v552
    %v929 = vpack.c.b16 %v561, %v557
    %v930 = vpack.c.b16 %v562, %v558
    %v931 = vpack.c.b16 %v563, %v559
    %v932 = vpack.c.b16 %v564, %v560
    %v933 = vpack.c.b16 %v569, %v565
    %v934 = vpack.c.b16 %v570, %v566
    %v935 = vpack.c.b16 %v571, %v567
    %v936 = vpack.c.b16 %v572, %v568
    %v937 = vpack.c.b16 %v577, %v573
    %v938 = vpack.c.b16 %v578, %v574
    %v939 = vpack.c.b16 %v579, %v575
    %v940 = vpack.c.b16 %v580, %v576
    %v941 = vpack.c.b16 %v585, %v581
    %v942 = vpack.c.b16 %v586, %v582
    %v943 = vpack.c.b16 %v587, %v583
    %v944 = vpack.c.b16 %v588, %v584
    %v945 = vpack.c.b16 %v593, %v589
    %v946 = vpack.c.b16 %v594, %v590
    %v947 = vpack.c.b16 %v595, %v591
    %v948 = vpack.c.b16 %v596, %v592
    %v949 = vpack.c.b16 %v601, %v597
    %v950 = vpack.c.b16 %v602, %v598
    %v951 = vpack.c.b16 %v603, %v599
    %v952 = vpack.c.b16 %v604, %v600
    %v953 = vpack.c.b16 %v609, %v605
    %v954 = vpack.c.b16 %v610, %v606
    %v955 = vpack.c.b16 %v611, %v607
    %v956 = vpack.c.b16 %v612, %v608
    %v957 = vpack.c.b16 %v617, %v613
    %v958 = vpack.c.b16 %v618, %v614
    %v959 = vpack.c.b16 %v619, %v615
    %v960 = vpack.c.b16 %v620, %v616
    %v961 = vpack.c.b16 %v625, %v621
    %v962 = vpack.c.b16 %v626, %v622
    %v963 = vpack.c.b16 %v627, %v623
    %v964 = vpack.c.b16 %v628, %v624
    %v965 = vpack.c.b16 %v633, %v629
    %v966 = vpack.c.b16 %v634, %v630
    %v967 = vpack.c.b16 %v635, %v631
    %v968 = vpack.c.b16 %v636, %v632
    %v969 = vpack.c.b16 %v641, %v637
    %v970 = vpack.c.b16 %v642, %v638
    %v971 = vpack.c.b16 %v643, %v639
    %v972 = vpack.c.b16 %v644, %v640
    %v973 = vpack.c.b16 %v649, %v645
    %v974 = vpack.c.b16 %v650, %v646
    %v975 = vpack.c.b16 %v651, %v647
    %v976 = vpack.c.b16 %v652, %v648
    %v977 = vpack.c.b16 %v657, %v653
    %v978 = vpack.c.b16 %v658, %v654
    %v979 = vpack.c.b16 %v659, %v655
    %v980 = vpack.c.b16 %v660, %v656
    %v981 = vpack.c.b16 %v665, %v661
    %v982 = vpack.c.b16 %v666, %v662
    %v983 = vpack.c.b16 %v667, %v663
    %v984 = vpack.c.b16 %v668, %v664
    %v985 = vpack.c.b16 %v673, %v669
    %v986 = vpack.c.b16 %v674, %v670
    %v987 = vpack.c.b16 %v675, %v671
    %v988 = vpack.c.b16 %v676, %v672
    %v989 = vpack.c.b16 %v681, %v677
    %v990 = vpack.c.b16 %v682, %v678
    %v991 = vpack.c.b16 %v683, %v679
    %v992 = vpack.c.b16 %v684, %v680
    %v993 = vpack.c.b16 %v689, %v685
    %v994 = vpack.c.b16 %v690, %v686
    %v995 = vpack.c.b16 %v691, %v687
    %v996 = vpack.c.b16 %v692, %v688
    %v997 = vpack.c.b16 %v697, %v693
    %v998 = vpack.c.b16 %v698, %v694
    %v999 = vpack.c.b16 %v699, %v695
    %v1000 = vpack.c.b16 %v700, %v696
    %v1001 = vpack.c.b16 %v705, %v701
    %v1002 = vpack.c.b16 %v706, %v702
    %v1003 = vpack.c.b16 %v707, %v703
    %v1004 = vpack.c.b16 %v708, %v704
    %v1005 = vpack.c.b16 %v713, %v709
    %v1006 = vpack.c.b16 %v714, %v710
    %v1007 = vpack.c.b16 %v715, %v711
    %v1008 = vpack.c.b16 %v716, %v712
    %v1009 = vpack.c.b16 %v721, %v717
    %v1010 = vpack.c.b16 %v722, %v718
    %v1011 = vpack.c.b16 %v723, %v719
    %v1012 = vpack.c.b16 %v724, %v720
    %v1013 = vpack.c.b16 %v729, %v725
    %v1014 = vpack.c.b16 %v730, %v726
    %v1015 = vpack.c.b16 %v731, %v727
    %v1016 = vpack.c.b16 %v732, %v728
    %v1017 = vpack.c.b16 %v737, %v733
    %v1018 = vpack.c.b16 %v738, %v734
    %v1019 = vpack.c.b16 %v739, %v735
    %v1020 = vpack.c.b16 %v740, %v736
    %v1021 = vpack.c.b16 %v745, %v741
    %v1022 = vpack.c.b16 %v746, %v742
    %v1023 = vpack.c.b16 %v747, %v743
    %v1024 = vpack.c.b16 %v748, %v744
    %v1025 = vpack.c.b16 %v753, %v749
    %v1026 = vpack.c.b16 %v754, %v750
    %v1027 = vpack.c.b16 %v755, %v751
    %v1028 = vpack.c.b16 %v756, %v752
    %v1029 = vpack.c.b16 %v761, %v757
    %v1030 = vpack.c.b16 %v762, %v758
    %v1031 = vpack.c.b16 %v763, %v759
    %v1032 = vpack.c.b16 %v764, %v760
    %v1033 = vpack.c.b16 %v769, %v765
    %v1034 = vpack.c.b16 %v770, %v766
    %v1035 = vpack.c.b16 %v771, %v767
    %v1036 = vpack.c.b16 %v772, %v768
    %v1037 = vpack.c.b16 %v777, %v773
    %v1038 = vpack.c.b16 %v778, %v774
    %v1039 = vpack.c.b16 %v779, %v775
    %v1040 = vpack.c.b16 %v780, %v776
    %v1041 = vpack.c.b16 %v785, %v781
    %v1042 = vpack.c.b16 %v786, %v782
    %v1043 = vpack.c.b16 %v787, %v783
    %v1044 = vpack.c.b16 %v788, %v784
    %v1045 = vpack.c.b16 %v793, %v789
    %v1046 = vpack.c.b16 %v794, %v790
    %v1047 = vpack.c.b16 %v795, %v791
    %v1048 = vpack.c.b16 %v796, %v792
    %v1049 = vpack.c.b16 %v801, %v797
    %v1050 = vpack.c.b16 %v802, %v798
    %v1051 = vpack.c.b16 %v803, %v799
    %v1052 = vpack.c.b16 %v804, %v800
    %v1053 = vpack.c.b16 %v809, %v805
    %v1054 = vpack.c.b16 %v810, %v806
    %v1055 = vpack.c.b16 %v811, %v807
    %v1056 = vpack.c.b16 %v812, %v808
    %v1057 = vpack.c.b16 %v817, %v813
    %v1058 = vpack.c.b16 %v818, %v814
    %v1059 = vpack.c.b16 %v819, %v815
    %v1060 = vpack.c.b16 %v820, %v816
    %v1061 = vpack.c.b16 %v825, %v821
    %v1062 = vpack.c.b16 %v826, %v822
    %v1063 = vpack.c.b16 %v827, %v823
    %v1064 = vpack.c.b16 %v828, %v824
    %v1065 = vpack.c.b16 %v833, %v829
    %v1066 = vpack.c.b16 %v834, %v830
    %v1067 = vpack.c.b16 %v835, %v831
    %v1068 = vpack.c.b16 %v836, %v832
    %v1069 = vpack.c.b16 %v841, %v837
    %v1070 = vpack.c.b16 %v842, %v838
    %v1071 = vpack.c.b16 %v843, %v839
    %v1072 = vpack.c.b16 %v844, %v840
    %v1073 = vpack.c.b16 %v849, %v845
    %v1074 = vpack.c.b16 %v850, %v846
    %v1075 = vpack.c.b16 %v851, %v847
    %v1076 = vpack.c.b16 %v852, %v848
    %v1077 = vpack.c.b16 %v857, %v853
    %v1078 = vpack.c.b16 %v858, %v854
    %v1079 = vpack.c.b16 %v859, %v855
    %v1080 = vpack.c.b16 %v860, %v856
    %v1081 = vpack.c.b16 %v865, %v861
    %v1082 = vpack.c.b16 %v866, %v862
    %v1083 = vpack.c.b16 %v867, %v863
    %v1084 = vpack.c.b16 %v868, %v864
    %v1085 = vpack.c.b16 %v873, %v869
    %v1086 = vpack.c.b16 %v874, %v870
    %v1087 = vpack.c.b16 %v875, %v871
    %v1088 = vpack.c.b16 %v876, %v872
    %v1089 = vpack.c.b16 %v881, %v877
    %v1090 = vpack.c.b16 %v882, %v878
    %v1091 = vpack.c.b16 %v883, %v879
    %v1092 = vpack.c.b16 %v884, %v880
    %v1093 = vpack.c.b16 %v889, %v885
    %v1094 = vpack.c.b16 %v890, %v886
    %v1095 = vpack.c.b16 %v891, %v887
    %v1096 = vpack.c.b16 %v892, %v888
    %v1097 = vpack.c.b16 %v897, %v893
    %v1098 = vpack.c.b16 %v898, %v894
    %v1099 = vpack.c.b16 %v899, %v895
    %v1100 = vpack.c.b16 %v900, %v896
    %v1101 = vpack.c.b16 %v905, %v901
    %v1102 = vpack.c.b16 %v906, %v902
    %v1103 = vpack.c.b16 %v907, %v903
    %v1104 = vpack.c.b16 %v908, %v904
    %vm1301 = vcmask 130048
    %v1303 = vsel %vm1301, %v102, 0
    %1305 = vmatprep.subr.bf16.mxu0 %v910
    %1306 = vmatpush1.bf16.msra.mxu0 %v909
    %1307 = vmatprep.subr.bf16.mxu0 %v914
    %1308 = vmatpush1.bf16.msra.mxu0 %v913
    %1309 = vmatprep.subr.bf16.mxu0 %v918
    %1310 = vmatpush1.bf16.msra.mxu0 %v917
    %1311 = vmatprep.subr.bf16.mxu0 %v922
    %1312 = vmatpush1.bf16.msra.mxu0 %v921
    %1313 = vmatprep.subr.bf16.mxu0 %v926
    %1314 = vmatpush1.bf16.msra.mxu0 %v925
    %1315 = vmatprep.subr.bf16.mxu0 %v930
    %1316 = vmatpush1.bf16.msra.mxu0 %v929
    %1317 = vmatprep.subr.bf16.mxu0 %v934
    %1318 = vmatpush1.bf16.msra.mxu0 %v933
    %1319 = vmatprep.subr.bf16.mxu0 %v938
    %1320 = vmatpush1.bf16.msra.mxu0 %v937
    %1321 = vmatprep.subr.bf16.mxu0 %v942
    %1322 = vmatpush1.bf16.msra.mxu0 %v941
    %1323 = vmatprep.subr.bf16.mxu0 %v946
    %1324 = vmatpush1.bf16.msra.mxu0 %v945
    %1325 = vmatprep.subr.bf16.mxu0 %v950
    %1326 = vmatpush1.bf16.msra.mxu0 %v949
    %1327 = vmatprep.subr.bf16.mxu0 %v954
    %1328 = vmatpush1.bf16.msra.mxu0 %v953
    %1329 = vmatprep.subr.bf16.mxu0 %v958
    %1330 = vmatpush1.bf16.msra.mxu0 %v957
    %1331 = vmatprep.subr.bf16.mxu0 %v962
    %1332 = vmatpush1.bf16.msra.mxu0 %v961
    %1333 = vmatprep.subr.bf16.mxu0 %v966
    %1334 = vmatpush1.bf16.msra.mxu0 %v965
    %1335 = vmatprep.subr.bf16.mxu0 %v970
    %1336 = vmatpush1.bf16.msra.mxu0 %v969
    %1337 = vmatprep.mubr.bf16.mxu0 %v97
    %1338 = vmatmul.mubr.bf16.gmra.mrb[0].mxu0 %v96
    %v1339 = vpop.f32.mrb[0].mxu0
    %v1340 = vadd.f32 %v304, %v1339
    %v1341 = vpop.f32.mrb[0].mxu0
    %v1342 = vadd.f32 %v308, %v1341
    %v1343 = vpop.f32.mrb[0].mxu0
    %v1344 = vadd.f32 %v304, %v1343
    %v1345 = vpop.f32.mrb[0].mxu0
    %v1346 = vadd.f32 %v308, %v1345
    %1347 = vdwg.mxu0
    %1348 = vmatprep.subr.bf16.mxu0 %v974
    %1349 = vmatpush1.bf16.msra.mxu0 %v973
    %1350 = vmatprep.subr.bf16.mxu0 %v978
    %1351 = vmatpush1.bf16.msra.mxu0 %v977
    %1352 = vmatprep.subr.bf16.mxu0 %v982
    %1353 = vmatpush1.bf16.msra.mxu0 %v981
    %1354 = vmatprep.subr.bf16.mxu0 %v986
    %1355 = vmatpush1.bf16.msra.mxu0 %v985
    %1356 = vmatprep.subr.bf16.mxu0 %v990
    %1357 = vmatpush1.bf16.msra.mxu0 %v989
    %1358 = vmatprep.subr.bf16.mxu0 %v994
    %1359 = vmatpush1.bf16.msra.mxu0 %v993
    %1360 = vmatprep.subr.bf16.mxu0 %v998
    %1361 = vmatpush1.bf16.msra.mxu0 %v997
    %1362 = vmatprep.subr.bf16.mxu0 %v1002
    %1363 = vmatpush1.bf16.msra.mxu0 %v1001
    %1364 = vmatprep.subr.bf16.mxu0 %v1006
    %1365 = vmatpush1.bf16.msra.mxu0 %v1005
    %1366 = vmatprep.subr.bf16.mxu0 %v1010
    %1367 = vmatpush1.bf16.msra.mxu0 %v1009
    %1368 = vmatprep.subr.bf16.mxu0 %v1014
    %1369 = vmatpush1.bf16.msra.mxu0 %v1013
    %1370 = vmatprep.subr.bf16.mxu0 %v1018
    %1371 = vmatpush1.bf16.msra.mxu0 %v1017
    %1372 = vmatprep.subr.bf16.mxu0 %v1022
    %1373 = vmatpush1.bf16.msra.mxu0 %v1021
    %1374 = vmatprep.subr.bf16.mxu0 %v1026
    %1375 = vmatpush1.bf16.msra.mxu0 %v1025
    %1376 = vmatprep.subr.bf16.mxu0 %v1030
    %1377 = vmatpush1.bf16.msra.mxu0 %v1029
    %1378 = vmatprep.subr.bf16.mxu0 %v1034
    %1379 = vmatpush1.bf16.msra.mxu0 %v1033
    %1380 = vmatprep.mubr.bf16.mxu0 %v99
    %1381 = vmatmul.mubr.bf16.gmra.mrb[0].mxu0 %v98
    %v1382 = vpop.f32.mrb[0].mxu0
    %v1383 = vadd.f32 %v1340, %v1382
    %v1384 = vpop.f32.mrb[0].mxu0
    %v1385 = vadd.f32 %v1342, %v1384
    %v1386 = vpop.f32.mrb[0].mxu0
    %v1387 = vadd.f32 %v1344, %v1386
    %v1388 = vpop.f32.mrb[0].mxu0
    %v1389 = vadd.f32 %v1346, %v1388
    %1390 = vdwg.mxu0
    %1391 = vmatprep.subr.bf16.mxu0 %v1038
    %1392 = vmatpush1.bf16.msra.mxu0 %v1037
    %1393 = vmatprep.subr.bf16.mxu0 %v1042
    %1394 = vmatpush1.bf16.msra.mxu0 %v1041
    %1395 = vmatprep.subr.bf16.mxu0 %v1046
    %1396 = vmatpush1.bf16.msra.mxu0 %v1045
    %1397 = vmatprep.subr.bf16.mxu0 %v1050
    %1398 = vmatpush1.bf16.msra.mxu0 %v1049
    %1399 = vmatprep.subr.bf16.mxu0 %v1054
    %1400 = vmatpush1.bf16.msra.mxu0 %v1053
    %1401 = vmatprep.subr.bf16.mxu0 %v1058
    %1402 = vmatpush1.bf16.msra.mxu0 %v1057
    %1403 = vmatprep.subr.bf16.mxu0 %v1062
    %1404 = vmatpush1.bf16.msra.mxu0 %v1061
    %1405 = vmatprep.subr.bf16.mxu0 %v1066
    %1406 = vmatpush1.bf16.msra.mxu0 %v1065
    %1407 = vmatprep.subr.bf16.mxu0 %v1070
    %1408 = vmatpush1.bf16.msra.mxu0 %v1069
    %1409 = vmatprep.subr.bf16.mxu0 %v1074
    %1410 = vmatpush1.bf16.msra.mxu0 %v1073
    %1411 = vmatprep.subr.bf16.mxu0 %v1078
    %1412 = vmatpush1.bf16.msra.mxu0 %v1077
    %1413 = vmatprep.subr.bf16.mxu0 %v1082
    %1414 = vmatpush1.bf16.msra.mxu0 %v1081
    %1415 = vmatprep.subr.bf16.mxu0 %v1086
    %1416 = vmatpush1.bf16.msra.mxu0 %v1085
    %1417 = vmatprep.subr.bf16.mxu0 %v1090
    %1418 = vmatpush1.bf16.msra.mxu0 %v1089
    %1419 = vmatprep.subr.bf16.mxu0 %v1094
    %1420 = vmatpush1.bf16.msra.mxu0 %v1093
    %1421 = vmatprep.subr.bf16.mxu0 %v1098
    %1422 = vmatpush1.bf16.msra.mxu0 %v1097
    %1423 = vmatprep.mubr.bf16.mxu0 %v101
    %1424 = vmatmul.mubr.bf16.gmra.mrb[0].mxu0 %v100
    %v1425 = vpop.f32.mrb[0].mxu0
    %v1426 = vadd.f32 %v1383, %v1425
    %v1427 = vpop.f32.mrb[0].mxu0
    %v1428 = vadd.f32 %v1385, %v1427
    %v1429 = vpop.f32.mrb[0].mxu0
    %v1430 = vadd.f32 %v1387, %v1429
    %v1431 = vpop.f32.mrb[0].mxu0
    %v1432 = vadd.f32 %v1389, %v1431
    %1433 = vdwg.mxu0
    %1434 = vmatprep.subr.bf16.mxu0 %v1102
    %1435 = vmatpush1.bf16.msra.mxu0 %v1101
    %1436 = vmatprep.subr.bf16.mxu0 0
    %1437 = vmatpush1.bf16.msra.mxu0 0
    %1438 = vmatprep.subr.bf16.mxu0 0
    %1439 = vmatpush1.bf16.msra.mxu0 0
    %1440 = vmatprep.subr.bf16.mxu0 0
    %1441 = vmatpush1.bf16.msra.mxu0 0
    %1442 = vmatprep.subr.bf16.mxu0 0
    %1443 = vmatpush1.bf16.msra.mxu0 0
    %1444 = vmatprep.subr.bf16.mxu0 0
    %1445 = vmatpush1.bf16.msra.mxu0 0
    %1446 = vmatprep.subr.bf16.mxu0 0
    %1447 = vmatpush1.bf16.msra.mxu0 0
    %1448 = vmatprep.subr.bf16.mxu0 0
    %1449 = vmatpush1.bf16.msra.mxu0 0
    %1450 = vmatprep.subr.bf16.mxu0 0
    %1451 = vmatpush1.bf16.msra.mxu0 0
    %1452 = vmatprep.subr.bf16.mxu0 0
    %1453 = vmatpush1.bf16.msra.mxu0 0
    %1454 = vmatprep.subr.bf16.mxu0 0
    %1455 = vmatpush1.bf16.msra.mxu0 0
    %1456 = vmatprep.subr.bf16.mxu0 0
    %1457 = vmatpush1.bf16.msra.mxu0 0
    %1458 = vmatprep.subr.bf16.mxu0 0
    %1459 = vmatpush1.bf16.msra.mxu0 0
    %1460 = vmatprep.subr.bf16.mxu0 0
    %1461 = vmatpush1.bf16.msra.mxu0 0
    %1462 = vmatprep.subr.bf16.mxu0 0
    %1463 = vmatpush1.bf16.msra.mxu0 0
    %1464 = vmatprep.subr.bf16.mxu0 0
    %1465 = vmatpush1.bf16.msra.mxu0 0
    %1466 = vmatprep.mubr.bf16.mxu0 0
    %1467 = vmatmul.mubr.bf16.gmra.mrb[0].mxu0 %v1303
    %v1468 = vpop.f32.mrb[0].mxu0
    %v1469 = vadd.f32 %v1426, %v1468
    %v1470 = vpop.f32.mrb[0].mxu0
    %v1471 = vadd.f32 %v1428, %v1470
    %v1472 = vpop.f32.mrb[0].mxu0
    %v1473 = vadd.f32 %v1430, %v1472
    %v1474 = vpop.f32.mrb[0].mxu0
    %v1475 = vadd.f32 %v1432, %v1474
    %1476 = vdwg.mxu0
    %1477 = vmatprep.subr.bf16.mxu0 %v912
    %1478 = vmatpush1.bf16.msra.mxu0 %v911
    %1479 = vmatprep.subr.bf16.mxu0 %v916
    %1480 = vmatpush1.bf16.msra.mxu0 %v915
    %1481 = vmatprep.subr.bf16.mxu0 %v920
    %1482 = vmatpush1.bf16.msra.mxu0 %v919
    %1483 = vmatprep.subr.bf16.mxu0 %v924
    %1484 = vmatpush1.bf16.msra.mxu0 %v923
    %1485 = vmatprep.subr.bf16.mxu0 %v928
    %1486 = vmatpush1.bf16.msra.mxu0 %v927
    %1487 = vmatprep.subr.bf16.mxu0 %v932
    %1488 = vmatpush1.bf16.msra.mxu0 %v931
    %1489 = vmatprep.subr.bf16.mxu0 %v936
    %1490 = vmatpush1.bf16.msra.mxu0 %v935
    %1491 = vmatprep.subr.bf16.mxu0 %v940
    %1492 = vmatpush1.bf16.msra.mxu0 %v939
    %1493 = vmatprep.subr.bf16.mxu0 %v944
    %1494 = vmatpush1.bf16.msra.mxu0 %v943
    %1495 = vmatprep.subr.bf16.mxu0 %v948
    %1496 = vmatpush1.bf16.msra.mxu0 %v947
    %1497 = vmatprep.subr.bf16.mxu0 %v952
    %1498 = vmatpush1.bf16.msra.mxu0 %v951
    %1499 = vmatprep.subr.bf16.mxu0 %v956
    %1500 = vmatpush1.bf16.msra.mxu0 %v955
    %1501 = vmatprep.subr.bf16.mxu0 %v960
    %1502 = vmatpush1.bf16.msra.mxu0 %v959
    %1503 = vmatprep.subr.bf16.mxu0 %v964
    %1504 = vmatpush1.bf16.msra.mxu0 %v963
    %1505 = vmatprep.subr.bf16.mxu0 %v968
    %1506 = vmatpush1.bf16.msra.mxu0 %v967
    %1507 = vmatprep.subr.bf16.mxu0 %v972
    %1508 = vmatpush1.bf16.msra.mxu0 %v971
    %1509 = vmatprep.mubr.bf16.mxu0 %v97
    %1510 = vmatmul.mubr.bf16.gmra.mrb[0].mxu0 %v96
    %v1511 = vpop.f32.mrb[0].mxu0
    %v1512 = vadd.f32 %v312, %v1511
    %v1513 = vpop.f32.mrb[0].mxu0
    %v1514 = vadd.f32 %v316, %v1513
    %v1515 = vpop.f32.mrb[0].mxu0
    %v1516 = vadd.f32 %v312, %v1515
    %v1517 = vpop.f32.mrb[0].mxu0
    %v1518 = vadd.f32 %v316, %v1517
    %1519 = vdwg.mxu0
    %1520 = vmatprep.subr.bf16.mxu0 %v976
    %1521 = vmatpush1.bf16.msra.mxu0 %v975
    %1522 = vmatprep.subr.bf16.mxu0 %v980
    %1523 = vmatpush1.bf16.msra.mxu0 %v979
    %1524 = vmatprep.subr.bf16.mxu0 %v984
    %1525 = vmatpush1.bf16.msra.mxu0 %v983
    %1526 = vmatprep.subr.bf16.mxu0 %v988
    %1527 = vmatpush1.bf16.msra.mxu0 %v987
    %1528 = vmatprep.subr.bf16.mxu0 %v992
    %1529 = vmatpush1.bf16.msra.mxu0 %v991
    %1530 = vmatprep.subr.bf16.mxu0 %v996
    %1531 = vmatpush1.bf16.msra.mxu0 %v995
    %1532 = vmatprep.subr.bf16.mxu0 %v1000
    %1533 = vmatpush1.bf16.msra.mxu0 %v999
    %1534 = vmatprep.subr.bf16.mxu0 %v1004
    %1535 = vmatpush1.bf16.msra.mxu0 %v1003
    %1536 = vmatprep.subr.bf16.mxu0 %v1008
    %1537 = vmatpush1.bf16.msra.mxu0 %v1007
    %1538 = vmatprep.subr.bf16.mxu0 %v1012
    %1539 = vmatpush1.bf16.msra.mxu0 %v1011
    %1540 = vmatprep.subr.bf16.mxu0 %v1016
    %1541 = vmatpush1.bf16.msra.mxu0 %v1015
    %1542 = vmatprep.subr.bf16.mxu0 %v1020
    %1543 = vmatpush1.bf16.msra.mxu0 %v1019
    %1544 = vmatprep.subr.bf16.mxu0 %v1024
    %1545 = vmatpush1.bf16.msra.mxu0 %v1023
    %1546 = vmatprep.subr.bf16.mxu0 %v1028
    %1547 = vmatpush1.bf16.msra.mxu0 %v1027
    %1548 = vmatprep.subr.bf16.mxu0 %v1032
    %1549 = vmatpush1.bf16.msra.mxu0 %v1031
    %1550 = vmatprep.subr.bf16.mxu0 %v1036
    %1551 = vmatpush1.bf16.msra.mxu0 %v1035
    %1552 = vmatprep.mubr.bf16.mxu0 %v99
    %1553 = vmatmul.mubr.bf16.gmra.mrb[0].mxu0 %v98
    %v1554 = vpop.f32.mrb[0].mxu0
    %v1555 = vadd.f32 %v1512, %v1554
    %v1556 = vpop.f32.mrb[0].mxu0
    %v1557 = vadd.f32 %v1514, %v1556
    %v1558 = vpop.f32.mrb[0].mxu0
    %v1559 = vadd.f32 %v1516, %v1558
    %v1560 = vpop.f32.mrb[0].mxu0
    %v1561 = vadd.f32 %v1518, %v1560
    %1562 = vdwg.mxu0
    %1563 = vmatprep.subr.bf16.mxu0 %v1040
    %1564 = vmatpush1.bf16.msra.mxu0 %v1039
    %1565 = vmatprep.subr.bf16.mxu0 %v1044
    %1566 = vmatpush1.bf16.msra.mxu0 %v1043
    %1567 = vmatprep.subr.bf16.mxu0 %v1048
    %1568 = vmatpush1.bf16.msra.mxu0 %v1047
    %1569 = vmatprep.subr.bf16.mxu0 %v1052
    %1570 = vmatpush1.bf16.msra.mxu0 %v1051
    %1571 = vmatprep.subr.bf16.mxu0 %v1056
    %1572 = vmatpush1.bf16.msra.mxu0 %v1055
    %1573 = vmatprep.subr.bf16.mxu0 %v1060
    %1574 = vmatpush1.bf16.msra.mxu0 %v1059
    %1575 = vmatprep.subr.bf16.mxu0 %v1064
    %1576 = vmatpush1.bf16.msra.mxu0 %v1063
    %1577 = vmatprep.subr.bf16.mxu0 %v1068
    %1578 = vmatpush1.bf16.msra.mxu0 %v1067
    %1579 = vmatprep.subr.bf16.mxu0 %v1072
    %1580 = vmatpush1.bf16.msra.mxu0 %v1071
    %1581 = vmatprep.subr.bf16.mxu0 %v1076
    %1582 = vmatpush1.bf16.msra.mxu0 %v1075
    %1583 = vmatprep.subr.bf16.mxu0 %v1080
    %1584 = vmatpush1.bf16.msra.mxu0 %v1079
    %1585 = vmatprep.subr.bf16.mxu0 %v1084
    %1586 = vmatpush1.bf16.msra.mxu0 %v1083
    %1587 = vmatprep.subr.bf16.mxu0 %v1088
    %1588 = vmatpush1.bf16.msra.mxu0 %v1087
    %1589 = vmatprep.subr.bf16.mxu0 %v1092
    %1590 = vmatpush1.bf16.msra.mxu0 %v1091
    %1591 = vmatprep.subr.bf16.mxu0 %v1096
    %1592 = vmatpush1.bf16.msra.mxu0 %v1095
    %1593 = vmatprep.subr.bf16.mxu0 %v1100
    %1594 = vmatpush1.bf16.msra.mxu0 %v1099
    %1595 = vmatprep.mubr.bf16.mxu0 %v101
    %1596 = vmatmul.mubr.bf16.gmra.mrb[0].mxu0 %v100
    %v1597 = vpop.f32.mrb[0].mxu0
    %v1598 = vadd.f32 %v1555, %v1597
    %v1599 = vpop.f32.mrb[0].mxu0
    %v1600 = vadd.f32 %v1557, %v1599
    %v1601 = vpop.f32.mrb[0].mxu0
    %v1602 = vadd.f32 %v1559, %v1601
    %v1603 = vpop.f32.mrb[0].mxu0
    %v1604 = vadd.f32 %v1561, %v1603
    %1605 = vdwg.mxu0
    %1606 = vmatprep.subr.bf16.mxu0 %v1104
    %1607 = vmatpush1.bf16.msra.mxu0 %v1103
    %1608 = vmatprep.subr.bf16.mxu0 0
    %1609 = vmatpush1.bf16.msra.mxu0 0
    %1610 = vmatprep.subr.bf16.mxu0 0
    %1611 = vmatpush1.bf16.msra.mxu0 0
    %1612 = vmatprep.subr.bf16.mxu0 0
    %1613 = vmatpush1.bf16.msra.mxu0 0
    %1614 = vmatprep.subr.bf16.mxu0 0
    %1615 = vmatpush1.bf16.msra.mxu0 0
    %1616 = vmatprep.subr.bf16.mxu0 0
    %1617 = vmatpush1.bf16.msra.mxu0 0
    %1618 = vmatprep.subr.bf16.mxu0 0
    %1619 = vmatpush1.bf16.msra.mxu0 0
    %1620 = vmatprep.subr.bf16.mxu0 0
    %1621 = vmatpush1.bf16.msra.mxu0 0
    %1622 = vmatprep.subr.bf16.mxu0 0
    %1623 = vmatpush1.bf16.msra.mxu0 0
    %1624 = vmatprep.subr.bf16.mxu0 0
    %1625 = vmatpush1.bf16.msra.mxu0 0
    %1626 = vmatprep.subr.bf16.mxu0 0
    %1627 = vmatpush1.bf16.msra.mxu0 0
    %1628 = vmatprep.subr.bf16.mxu0 0
    %1629 = vmatpush1.bf16.msra.mxu0 0
    %1630 = vmatprep.subr.bf16.mxu0 0
    %1631 = vmatpush1.bf16.msra.mxu0 0
    %1632 = vmatprep.subr.bf16.mxu0 0
    %1633 = vmatpush1.bf16.msra.mxu0 0
    %1634 = vmatprep.subr.bf16.mxu0 0
    %1635 = vmatpush1.bf16.msra.mxu0 0
    %1636 = vmatprep.subr.bf16.mxu0 0
    %1637 = vmatpush1.bf16.msra.mxu0 0
    %1638 = vmatprep.mubr.bf16.mxu0 0
    %1639 = vmatmul.mubr.bf16.gmra.mrb[0].mxu0 %v1303
    %v1640 = vpop.f32.mrb[0].mxu0
    %v1641 = vadd.f32 %v1598, %v1640
    %v1642 = vpop.f32.mrb[0].mxu0
    %v1643 = vadd.f32 %v1600, %v1642
    %v1644 = vpop.f32.mrb[0].mxu0
    %v1645 = vadd.f32 %v1602, %v1644
    %v1646 = vpop.f32.mrb[0].mxu0
    %v1647 = vadd.f32 %v1604, %v1646
    %1648 = vdwg.mxu0
    %vm1649 = vcmp.gt.f32.partialorder %v1469, 0.0
    %vm1650 = vcmp.gt.f32.partialorder %v1471, 0.0
    %vm1651 = vcmp.gt.f32.partialorder %v1641, 0.0
    %vm1652 = vcmp.gt.f32.partialorder %v1643, 0.0
    %vm1653 = vcmp.gt.f32.partialorder %v1473, 0.0
    %vm1654 = vcmp.gt.f32.partialorder %v1475, 0.0
    %vm1655 = vcmp.gt.f32.partialorder %v1645, 0.0
    %vm1656 = vcmp.gt.f32.partialorder %v1647, 0.0
    %v1657 = vmul.f32 %v1469, 0.2
    %v1658 = vmul.f32 %v1471, 0.2
    %v1659 = vmul.f32 %v1641, 0.2
    %v1660 = vmul.f32 %v1643, 0.2
    %v1661 = vmul.f32 %v1473, 0.2
    %v1662 = vmul.f32 %v1475, 0.2
    %v1663 = vmul.f32 %v1645, 0.2
    %v1664 = vmul.f32 %v1647, 0.2
    %v1665 = vsel %vm1649, %v1469, %v1657
    %v1666 = vsel %vm1650, %v1471, %v1658
    %v1667 = vsel %vm1651, %v1641, %v1659
    %v1668 = vsel %vm1652, %v1643, %v1660
    %v1669 = vsel %vm1653, %v1473, %v1661
    %v1670 = vsel %vm1654, %v1475, %v1662
    %v1671 = vsel %vm1655, %v1645, %v1663
    %v1672 = vsel %vm1656, %v1647, %v1664
    %v1673 = vpack.c.bf16 %v1669, %v1665
    %v1674 = vpack.c.bf16 %v1670, %v1666
    %v1675 = vpack.c.bf16 %v1671, %v1667
    %v1676 = vpack.c.bf16 %v1672, %v1668
    %v1677 = vld [vmem:[#allocation6] sm:$0xff]
    %v1678 = vld [vmem:[#allocation6 + $0x8] sm:$0xff]
    %v1679 = vld [vmem:[#allocation6 + $0x10] sm:$0xff]
    %v1680 = vld [vmem:[#allocation6 + $0x18] sm:$0xff]
    %v1681 = vld [vmem:[#allocation6 + $0x20] sm:$0xff]
    %v1682 = vld [vmem:[#allocation6 + $0x28] sm:$0xff]
    %v1683 = vld [vmem:[#allocation6 + $0x30] sm:$0xff]
    %v1684 = vld [vmem:[#allocation6 + $0x38] sm:$0xff]
    %v1685 = vld [vmem:[#allocation6 + $0x40] sm:$0xff]
    %v1686 = vld [vmem:[#allocation6 + $0x48] sm:$0xff]
    %v1687 = vld [vmem:[#allocation6 + $0x50] sm:$0xff]
    %v1688 = vld [vmem:[#allocation6 + $0x58] sm:$0xff]
    %v1689 = vld [vmem:[#allocation6 + $0x60] sm:$0xff]
    %v1690 = vld [vmem:[#allocation6 + $0x68] sm:$0xff]
    %v1691 = vld [vmem:[#allocation6 + $0x70] sm:$0xff]
    %v1692 = vld [vmem:[#allocation6 + $0x78] sm:$0xff]
    %v1693 = vld [vmem:[#allocation6 + $0x80] sm:$0xff]
    %v1694 = vld [vmem:[#allocation6 + $0x88] sm:$0xff]
    %v1695 = vld [vmem:[#allocation6 + $0x90] sm:$0xff]
    %v1696 = vld [vmem:[#allocation6 + $0x98] sm:$0xff]
    %v1697 = vld [vmem:[#allocation6 + $0xa0] sm:$0xff]
    %v1698 = vld [vmem:[#allocation6 + $0xa8] sm:$0xff]
    %v1699 = vld [vmem:[#allocation6 + $0xb0] sm:$0xff]
    %v1700 = vld [vmem:[#allocation6 + $0xb8] sm:$0xff]
    %v1701 = vld [vmem:[#allocation6 + $0xc0] sm:$0xff]
    %v1702 = vld [vmem:[#allocation6 + $0xc8] sm:$0xff]
    %v1703 = vld [vmem:[#allocation6 + $0xd0] sm:$0xff]
    %v1704 = vld [vmem:[#allocation6 + $0xd8] sm:$0xff]
    %v1705 = vld [vmem:[#allocation6 + $0xe0] sm:$0xff]
    %v1706 = vld [vmem:[#allocation6 + $0xe8] sm:$0xff]
    %v1707 = vld [vmem:[#allocation6 + $0xf0] sm:$0xff]
    %v1708 = vld [vmem:[#allocation6 + $0xf8] sm:$0xff]
    %v1709 = vld [vmem:[#allocation6 + $0x100] sm:$0xff]
    %v1710 = vld [vmem:[#allocation6 + $0x108] sm:$0xff]
    %v1711 = vld [vmem:[#allocation6 + $0x110] sm:$0xff]
    %v1712 = vld [vmem:[#allocation6 + $0x118] sm:$0xff]
    %v1713 = vld [vmem:[#allocation6 + $0x120] sm:$0xff]
    %v1714 = vld [vmem:[#allocation6 + $0x128] sm:$0xff]
    %v1715 = vld [vmem:[#allocation6 + $0x130] sm:$0xff]
    %v1716 = vld [vmem:[#allocation6 + $0x138] sm:$0xff]
    %v1717 = vld [vmem:[#allocation6 + $0x140] sm:$0xff]
    %v1718 = vld [vmem:[#allocation6 + $0x148] sm:$0xff]
    %v1719 = vld [vmem:[#allocation6 + $0x150] sm:$0xff]
    %v1720 = vld [vmem:[#allocation6 + $0x158] sm:$0xff]
    %v1721 = vld [vmem:[#allocation6 + $0x160] sm:$0xff]
    %v1722 = vld [vmem:[#allocation6 + $0x168] sm:$0xff]
    %v1723 = vld [vmem:[#allocation6 + $0x170] sm:$0xff]
    %v1724 = vld [vmem:[#allocation6 + $0x178] sm:$0xff]
    %v1725 = vld [vmem:[#allocation6 + $0x180] sm:$0xff]
    %v1726 = vld [vmem:[#allocation6 + $0x188] sm:$0xff]
    %v1727 = vld [vmem:[#allocation6 + $0x190] sm:$0xff]
    %v1728 = vld [vmem:[#allocation6 + $0x198] sm:$0xff]
    %v1729 = vld [vmem:[#allocation6 + $0x1a0] sm:$0xff]
    %v1730 = vld [vmem:[#allocation6 + $0x1a8] sm:$0xff]
    %v1731 = vld [vmem:[#allocation6 + $0x1b0] sm:$0xff]
    %v1732 = vld [vmem:[#allocation6 + $0x1b8] sm:$0xff]
    %v1733 = vld [vmem:[#allocation6 + $0x1c0] sm:$0xff]
    %v1734 = vld [vmem:[#allocation6 + $0x1c8] sm:$0xff]
    %v1735 = vld [vmem:[#allocation6 + $0x1d0] sm:$0xff]
    %v1736 = vld [vmem:[#allocation6 + $0x1d8] sm:$0xff]
    %v1737 = vld [vmem:[#allocation6 + $0x1e0] sm:$0xff]
    %v1738 = vld [vmem:[#allocation6 + $0x1e8] sm:$0xff]
    %v1739 = vld [vmem:[#allocation6 + $0x1f0] sm:$0xff]
    %v1740 = vld [vmem:[#allocation6 + $0x1f8] sm:$0xff]
    %v1741 = vld [vmem:[%s4] sm:$0x3]
    %v1743 = vlaneseq
    %v1744 = vshrl.u32 %v1743, 7
    %v1745 = vsub.s32 0, %v1744
    %v1746 = vrot.slane %v1741, %v1745
    %v1747 = vlaneseq
    %v1748 = vshrl.u32 %v1747, 7
    %v1749 = vsub.s32 1, %v1748
    %v1750 = vrot.slane %v1741, %v1749
    %v1817 = vunpack.c.l.b16 %v1677
    %v1818 = vunpack.c.h.b16 %v1677
    %v1819 = vunpack.c.l.b16 %v1678
    %v1820 = vunpack.c.h.b16 %v1678
    %v1821 = vunpack.c.l.b16 %v1679
    %v1822 = vunpack.c.h.b16 %v1679
    %v1823 = vunpack.c.l.b16 %v1680
    %v1824 = vunpack.c.h.b16 %v1680
    %v1825 = vunpack.c.l.b16 %v1681
    %v1826 = vunpack.c.h.b16 %v1681
    %v1827 = vunpack.c.l.b16 %v1682
    %v1828 = vunpack.c.h.b16 %v1682
    %v1829 = vunpack.c.l.b16 %v1683
    %v1830 = vunpack.c.h.b16 %v1683
    %v1831 = vunpack.c.l.b16 %v1684
    %v1832 = vunpack.c.h.b16 %v1684
    %v1833 = vunpack.c.l.b16 %v1685
    %v1834 = vunpack.c.h.b16 %v1685
    %v1835 = vunpack.c.l.b16 %v1686
    %v1836 = vunpack.c.h.b16 %v1686
    %v1837 = vunpack.c.l.b16 %v1687
    %v1838 = vunpack.c.h.b16 %v1687
    %v1839 = vunpack.c.l.b16 %v1688
    %v1840 = vunpack.c.h.b16 %v1688
    %v1841 = vunpack.c.l.b16 %v1689
    %v1842 = vunpack.c.h.b16 %v1689
    %v1843 = vunpack.c.l.b16 %v1690
    %v1844 = vunpack.c.h.b16 %v1690
    %v1845 = vunpack.c.l.b16 %v1691
    %v1846 = vunpack.c.h.b16 %v1691
    %v1847 = vunpack.c.l.b16 %v1692
    %v1848 = vunpack.c.h.b16 %v1692
    %v1849 = vunpack.c.l.b16 %v1693
    %v1850 = vunpack.c.h.b16 %v1693
    %v1851 = vunpack.c.l.b16 %v1694
    %v1852 = vunpack.c.h.b16 %v1694
    %v1853 = vunpack.c.l.b16 %v1695
    %v1854 = vunpack.c.h.b16 %v1695
    %v1855 = vunpack.c.l.b16 %v1696
    %v1856 = vunpack.c.h.b16 %v1696
    %v1857 = vunpack.c.l.b16 %v1697
    %v1858 = vunpack.c.h.b16 %v1697
    %v1859 = vunpack.c.l.b16 %v1698
    %v1860 = vunpack.c.h.b16 %v1698
    %v1861 = vunpack.c.l.b16 %v1699
    %v1862 = vunpack.c.h.b16 %v1699
    %v1863 = vunpack.c.l.b16 %v1700
    %v1864 = vunpack.c.h.b16 %v1700
    %v1865 = vunpack.c.l.b16 %v1701
    %v1866 = vunpack.c.h.b16 %v1701
    %v1867 = vunpack.c.l.b16 %v1702
    %v1868 = vunpack.c.h.b16 %v1702
    %v1869 = vunpack.c.l.b16 %v1703
    %v1870 = vunpack.c.h.b16 %v1703
    %v1871 = vunpack.c.l.b16 %v1704
    %v1872 = vunpack.c.h.b16 %v1704
    %v1873 = vunpack.c.l.b16 %v1705
    %v1874 = vunpack.c.h.b16 %v1705
    %v1875 = vunpack.c.l.b16 %v1706
    %v1876 = vunpack.c.h.b16 %v1706
    %v1877 = vunpack.c.l.b16 %v1707
    %v1878 = vunpack.c.h.b16 %v1707
    %v1879 = vunpack.c.l.b16 %v1708
    %v1880 = vunpack.c.h.b16 %v1708
    %v1881 = vunpack.c.l.b16 %v1709
    %v1882 = vunpack.c.h.b16 %v1709
    %v1883 = vunpack.c.l.b16 %v1710
    %v1884 = vunpack.c.h.b16 %v1710
    %v1885 = vunpack.c.l.b16 %v1711
    %v1886 = vunpack.c.h.b16 %v1711
    %v1887 = vunpack.c.l.b16 %v1712
    %v1888 = vunpack.c.h.b16 %v1712
    %v1889 = vunpack.c.l.b16 %v1713
    %v1890 = vunpack.c.h.b16 %v1713
    %v1891 = vunpack.c.l.b16 %v1714
    %v1892 = vunpack.c.h.b16 %v1714
    %v1893 = vunpack.c.l.b16 %v1715
    %v1894 = vunpack.c.h.b16 %v1715
    %v1895 = vunpack.c.l.b16 %v1716
    %v1896 = vunpack.c.h.b16 %v1716
    %v1897 = vunpack.c.l.b16 %v1717
    %v1898 = vunpack.c.h.b16 %v1717
    %v1899 = vunpack.c.l.b16 %v1718
    %v1900 = vunpack.c.h.b16 %v1718
    %v1901 = vunpack.c.l.b16 %v1719
    %v1902 = vunpack.c.h.b16 %v1719
    %v1903 = vunpack.c.l.b16 %v1720
    %v1904 = vunpack.c.h.b16 %v1720
    %v1905 = vunpack.c.l.b16 %v1721
    %v1906 = vunpack.c.h.b16 %v1721
    %v1907 = vunpack.c.l.b16 %v1722
    %v1908 = vunpack.c.h.b16 %v1722
    %v1909 = vunpack.c.l.b16 %v1723
    %v1910 = vunpack.c.h.b16 %v1723
    %v1911 = vunpack.c.l.b16 %v1724
    %v1912 = vunpack.c.h.b16 %v1724
    %v1913 = vunpack.c.l.b16 %v1725
    %v1914 = vunpack.c.h.b16 %v1725
    %v1915 = vunpack.c.l.b16 %v1726
    %v1916 = vunpack.c.h.b16 %v1726
    %v1917 = vunpack.c.l.b16 %v1727
    %v1918 = vunpack.c.h.b16 %v1727
    %v1919 = vunpack.c.l.b16 %v1728
    %v1920 = vunpack.c.h.b16 %v1728
    %v1921 = vunpack.c.l.b16 %v1729
    %v1922 = vunpack.c.h.b16 %v1729
    %v1923 = vunpack.c.l.b16 %v1730
    %v1924 = vunpack.c.h.b16 %v1730
    %v1925 = vunpack.c.l.b16 %v1731
    %v1926 = vunpack.c.h.b16 %v1731
    %v1927 = vunpack.c.l.b16 %v1732
    %v1928 = vunpack.c.h.b16 %v1732
    %v1929 = vunpack.c.l.b16 %v1733
    %v1930 = vunpack.c.h.b16 %v1733
    %v1931 = vunpack.c.l.b16 %v1734
    %v1932 = vunpack.c.h.b16 %v1734
    %v1933 = vunpack.c.l.b16 %v1735
    %v1934 = vunpack.c.h.b16 %v1735
    %v1935 = vunpack.c.l.b16 %v1736
    %v1936 = vunpack.c.h.b16 %v1736
    %v1937 = vunpack.c.l.b16 %v1737
    %v1938 = vunpack.c.h.b16 %v1737
    %v1939 = vunpack.c.l.b16 %v1738
    %v1940 = vunpack.c.h.b16 %v1738
    %v1941 = vunpack.c.l.b16 %v1739
    %v1942 = vunpack.c.h.b16 %v1739
    %v1943 = vunpack.c.l.b16 %v1740
    %v1944 = vunpack.c.h.b16 %v1740
    %v1945 = vpack.c.b16 %v1819, %v1817
    %v1946 = vpack.c.b16 %v1820, %v1818
    %v1947 = vpack.c.b16 %v1823, %v1821
    %v1948 = vpack.c.b16 %v1824, %v1822
    %v1949 = vpack.c.b16 %v1827, %v1825
    %v1950 = vpack.c.b16 %v1828, %v1826
    %v1951 = vpack.c.b16 %v1831, %v1829
    %v1952 = vpack.c.b16 %v1832, %v1830
    %v1953 = vpack.c.b16 %v1835, %v1833
    %v1954 = vpack.c.b16 %v1836, %v1834
    %v1955 = vpack.c.b16 %v1839, %v1837
    %v1956 = vpack.c.b16 %v1840, %v1838
    %v1957 = vpack.c.b16 %v1843, %v1841
    %v1958 = vpack.c.b16 %v1844, %v1842
    %v1959 = vpack.c.b16 %v1847, %v1845
    %v1960 = vpack.c.b16 %v1848, %v1846
    %v1961 = vpack.c.b16 %v1851, %v1849
    %v1962 = vpack.c.b16 %v1852, %v1850
    %v1963 = vpack.c.b16 %v1855, %v1853
    %v1964 = vpack.c.b16 %v1856, %v1854
    %v1965 = vpack.c.b16 %v1859, %v1857
    %v1966 = vpack.c.b16 %v1860, %v1858
    %v1967 = vpack.c.b16 %v1863, %v1861
    %v1968 = vpack.c.b16 %v1864, %v1862
    %v1969 = vpack.c.b16 %v1867, %v1865
    %v1970 = vpack.c.b16 %v1868, %v1866
    %v1971 = vpack.c.b16 %v1871, %v1869
    %v1972 = vpack.c.b16 %v1872, %v1870
    %v1973 = vpack.c.b16 %v1875, %v1873
    %v1974 = vpack.c.b16 %v1876, %v1874
    %v1975 = vpack.c.b16 %v1879, %v1877
    %v1976 = vpack.c.b16 %v1880, %v1878
    %v1977 = vpack.c.b16 %v1883, %v1881
    %v1978 = vpack.c.b16 %v1884, %v1882
    %v1979 = vpack.c.b16 %v1887, %v1885
    %v1980 = vpack.c.b16 %v1888, %v1886
    %v1981 = vpack.c.b16 %v1891, %v1889
    %v1982 = vpack.c.b16 %v1892, %v1890
    %v1983 = vpack.c.b16 %v1895, %v1893
    %v1984 = vpack.c.b16 %v1896, %v1894
    %v1985 = vpack.c.b16 %v1899, %v1897
    %v1986 = vpack.c.b16 %v1900, %v1898
    %v1987 = vpack.c.b16 %v1903, %v1901
    %v1988 = vpack.c.b16 %v1904, %v1902
    %v1989 = vpack.c.b16 %v1907, %v1905
    %v1990 = vpack.c.b16 %v1908, %v1906
    %v1991 = vpack.c.b16 %v1911, %v1909
    %v1992 = vpack.c.b16 %v1912, %v1910
    %v1993 = vpack.c.b16 %v1915, %v1913
    %v1994 = vpack.c.b16 %v1916, %v1914
    %v1995 = vpack.c.b16 %v1919, %v1917
    %v1996 = vpack.c.b16 %v1920, %v1918
    %v1997 = vpack.c.b16 %v1923, %v1921
    %v1998 = vpack.c.b16 %v1924, %v1922
    %v1999 = vpack.c.b16 %v1927, %v1925
    %v2000 = vpack.c.b16 %v1928, %v1926
    %v2001 = vpack.c.b16 %v1931, %v1929
    %v2002 = vpack.c.b16 %v1932, %v1930
    %v2003 = vpack.c.b16 %v1935, %v1933
    %v2004 = vpack.c.b16 %v1936, %v1934
    %v2005 = vpack.c.b16 %v1939, %v1937
    %v2006 = vpack.c.b16 %v1940, %v1938
    %v2007 = vpack.c.b16 %v1943, %v1941
    %v2008 = vpack.c.b16 %v1944, %v1942
    %2073 = vmatprep.subr.bf16.mxu0 %v1946
    %2074 = vmatpush1.bf16.msra.mxu0 %v1945
    %2075 = vmatprep.subr.bf16.mxu0 %v1948
    %2076 = vmatpush1.bf16.msra.mxu0 %v1947
    %2077 = vmatprep.subr.bf16.mxu0 %v1950
    %2078 = vmatpush1.bf16.msra.mxu0 %v1949
    %2079 = vmatprep.subr.bf16.mxu0 %v1952
    %2080 = vmatpush1.bf16.msra.mxu0 %v1951
    %2081 = vmatprep.subr.bf16.mxu0 %v1954
    %2082 = vmatpush1.bf16.msra.mxu0 %v1953
    %2083 = vmatprep.subr.bf16.mxu0 %v1956
    %2084 = vmatpush1.bf16.msra.mxu0 %v1955
    %2085 = vmatprep.subr.bf16.mxu0 %v1958
    %2086 = vmatpush1.bf16.msra.mxu0 %v1957
    %2087 = vmatprep.subr.bf16.mxu0 %v1960
    %2088 = vmatpush1.bf16.msra.mxu0 %v1959
    %2089 = vmatprep.subr.bf16.mxu0 %v1962
    %2090 = vmatpush1.bf16.msra.mxu0 %v1961
    %2091 = vmatprep.subr.bf16.mxu0 %v1964
    %2092 = vmatpush1.bf16.msra.mxu0 %v1963
    %2093 = vmatprep.subr.bf16.mxu0 %v1966
    %2094 = vmatpush1.bf16.msra.mxu0 %v1965
    %2095 = vmatprep.subr.bf16.mxu0 %v1968
    %2096 = vmatpush1.bf16.msra.mxu0 %v1967
    %2097 = vmatprep.subr.bf16.mxu0 %v1970
    %2098 = vmatpush1.bf16.msra.mxu0 %v1969
    %2099 = vmatprep.subr.bf16.mxu0 %v1972
    %2100 = vmatpush1.bf16.msra.mxu0 %v1971
    %2101 = vmatprep.subr.bf16.mxu0 %v1974
    %2102 = vmatpush1.bf16.msra.mxu0 %v1973
    %2103 = vmatprep.subr.bf16.mxu0 %v1976
    %2104 = vmatpush1.bf16.msra.mxu0 %v1975
    %2105 = vmatprep.mubr.bf16.mxu0 %v1674
    %2106 = vmatmul.mubr.bf16.gmra.mrb[0].mxu0 %v1673
    %v2107 = vpop.f32.mrb[0].mxu0
    %v2108 = vadd.f32 %v1746, %v2107
    %v2109 = vpop.f32.mrb[0].mxu0
    %v2110 = vadd.f32 %v1750, %v2109
    %v2111 = vpop.f32.mrb[0].mxu0
    %v2112 = vadd.f32 %v1746, %v2111
    %v2113 = vpop.f32.mrb[0].mxu0
    %v2114 = vadd.f32 %v1750, %v2113
    %2115 = vdwg.mxu0
    %2116 = vmatprep.subr.bf16.mxu0 %v1978
    %2117 = vmatpush1.bf16.msra.mxu0 %v1977
    %2118 = vmatprep.subr.bf16.mxu0 %v1980
    %2119 = vmatpush1.bf16.msra.mxu0 %v1979
    %2120 = vmatprep.subr.bf16.mxu0 %v1982
    %2121 = vmatpush1.bf16.msra.mxu0 %v1981
    %2122 = vmatprep.subr.bf16.mxu0 %v1984
    %2123 = vmatpush1.bf16.msra.mxu0 %v1983
    %2124 = vmatprep.subr.bf16.mxu0 %v1986
    %2125 = vmatpush1.bf16.msra.mxu0 %v1985
    %2126 = vmatprep.subr.bf16.mxu0 %v1988
    %2127 = vmatpush1.bf16.msra.mxu0 %v1987
    %2128 = vmatprep.subr.bf16.mxu0 %v1990
    %2129 = vmatpush1.bf16.msra.mxu0 %v1989
    %2130 = vmatprep.subr.bf16.mxu0 %v1992
    %2131 = vmatpush1.bf16.msra.mxu0 %v1991
    %2132 = vmatprep.subr.bf16.mxu0 %v1994
    %2133 = vmatpush1.bf16.msra.mxu0 %v1993
    %2134 = vmatprep.subr.bf16.mxu0 %v1996
    %2135 = vmatpush1.bf16.msra.mxu0 %v1995
    %2136 = vmatprep.subr.bf16.mxu0 %v1998
    %2137 = vmatpush1.bf16.msra.mxu0 %v1997
    %2138 = vmatprep.subr.bf16.mxu0 %v2000
    %2139 = vmatpush1.bf16.msra.mxu0 %v1999
    %2140 = vmatprep.subr.bf16.mxu0 %v2002
    %2141 = vmatpush1.bf16.msra.mxu0 %v2001
    %2142 = vmatprep.subr.bf16.mxu0 %v2004
    %2143 = vmatpush1.bf16.msra.mxu0 %v2003
    %2144 = vmatprep.subr.bf16.mxu0 %v2006
    %2145 = vmatpush1.bf16.msra.mxu0 %v2005
    %2146 = vmatprep.subr.bf16.mxu0 %v2008
    %2147 = vmatpush1.bf16.msra.mxu0 %v2007
    %2148 = vmatprep.mubr.bf16.mxu0 %v1676
    %2149 = vmatmul.mubr.bf16.gmra.mrb[0].mxu0 %v1675
    %v2150 = vpop.f32.mrb[0].mxu0
    %v2151 = vadd.f32 %v2108, %v2150
    %v2152 = vpop.f32.mrb[0].mxu0
    %v2153 = vadd.f32 %v2110, %v2152
    %v2154 = vpop.f32.mrb[0].mxu0
    %v2155 = vadd.f32 %v2112, %v2154
    %v2156 = vpop.f32.mrb[0].mxu0
    %v2157 = vadd.f32 %v2114, %v2156
    %2158 = vdwg.mxu0
    %vm2159 = vcmp.gt.f32.partialorder %v2151, 0.0
    %vm2160 = vcmp.gt.f32.partialorder %v2153, 0.0
    %vm2161 = vcmp.gt.f32.partialorder %v2155, 0.0
    %vm2162 = vcmp.gt.f32.partialorder %v2157, 0.0
    %v2163 = vmul.f32 %v2151, 0.2
    %v2164 = vmul.f32 %v2153, 0.2
    %v2165 = vmul.f32 %v2155, 0.2
    %v2166 = vmul.f32 %v2157, 0.2
    %v2167 = vsel %vm2159, %v2151, %v2163
    %v2168 = vsel %vm2160, %v2153, %v2164
    %v2169 = vsel %vm2161, %v2155, %v2165
    %v2170 = vsel %vm2162, %v2157, %v2166
    %v2171 = vpack.c.bf16 %v2169, %v2167
    %v2172 = vpack.c.bf16 %v2170, %v2168
    %v2173 = vld [vmem:[#allocation7] sm:$0xf]
    %v2174 = vld [vmem:[#allocation7 + $0x4] sm:$0xf]
    %v2175 = vld [vmem:[#allocation7 + $0x8] sm:$0xf]
    %v2176 = vld [vmem:[#allocation7 + $0xc] sm:$0xf]
    %v2177 = vld [vmem:[#allocation7 + $0x10] sm:$0xf]
    %v2178 = vld [vmem:[#allocation7 + $0x14] sm:$0xf]
    %v2179 = vld [vmem:[#allocation7 + $0x18] sm:$0xf]
    %v2180 = vld [vmem:[#allocation7 + $0x1c] sm:$0xf]
    %v2181 = vld [vmem:[#allocation7 + $0x20] sm:$0xf]
    %v2182 = vld [vmem:[#allocation7 + $0x24] sm:$0xf]
    %v2183 = vld [vmem:[#allocation7 + $0x28] sm:$0xf]
    %v2184 = vld [vmem:[#allocation7 + $0x2c] sm:$0xf]
    %v2185 = vld [vmem:[#allocation7 + $0x30] sm:$0xf]
    %v2186 = vld [vmem:[#allocation7 + $0x34] sm:$0xf]
    %v2187 = vld [vmem:[#allocation7 + $0x38] sm:$0xf]
    %v2188 = vld [vmem:[#allocation7 + $0x3c] sm:$0xf]
    %v2189 = vld [vmem:[#allocation7 + $0x40] sm:$0xf]
    %v2190 = vld [vmem:[#allocation7 + $0x44] sm:$0xf]
    %v2191 = vld [vmem:[#allocation7 + $0x48] sm:$0xf]
    %v2192 = vld [vmem:[#allocation7 + $0x4c] sm:$0xf]
    %v2193 = vld [vmem:[#allocation7 + $0x50] sm:$0xf]
    %v2194 = vld [vmem:[#allocation7 + $0x54] sm:$0xf]
    %v2195 = vld [vmem:[#allocation7 + $0x58] sm:$0xf]
    %v2196 = vld [vmem:[#allocation7 + $0x5c] sm:$0xf]
    %v2197 = vld [vmem:[#allocation7 + $0x60] sm:$0xf]
    %v2198 = vld [vmem:[#allocation7 + $0x64] sm:$0xf]
    %v2199 = vld [vmem:[#allocation7 + $0x68] sm:$0xf]
    %v2200 = vld [vmem:[#allocation7 + $0x6c] sm:$0xf]
    %v2201 = vld [vmem:[#allocation7 + $0x70] sm:$0xf]
    %v2202 = vld [vmem:[#allocation7 + $0x74] sm:$0xf]
    %v2203 = vld [vmem:[#allocation7 + $0x78] sm:$0xf]
    %v2204 = vld [vmem:[#allocation7 + $0x7c] sm:$0xf]
    %v2205 = vld [vmem:[%s6] sm:$0x1]
    %v2207 = vlaneseq
    %v2208 = vshrl.u32 %v2207, 7
    %v2209 = vsub.s32 0, %v2208
    %v2210 = vrot.slane %v2205, %v2209
    %v2244 = vunpack.c.l.b16 %v2173
    %v2245 = vunpack.c.l.b16 %v2174
    %v2246 = vunpack.c.l.b16 %v2175
    %v2247 = vunpack.c.l.b16 %v2176
    %v2248 = vunpack.c.l.b16 %v2177
    %v2249 = vunpack.c.l.b16 %v2178
    %v2250 = vunpack.c.l.b16 %v2179
    %v2251 = vunpack.c.l.b16 %v2180
    %v2252 = vunpack.c.l.b16 %v2181
    %v2253 = vunpack.c.l.b16 %v2182
    %v2254 = vunpack.c.l.b16 %v2183
    %v2255 = vunpack.c.l.b16 %v2184
    %v2256 = vunpack.c.l.b16 %v2185
    %v2257 = vunpack.c.l.b16 %v2186
    %v2258 = vunpack.c.l.b16 %v2187
    %v2259 = vunpack.c.l.b16 %v2188
    %v2260 = vunpack.c.l.b16 %v2189
    %v2261 = vunpack.c.l.b16 %v2190
    %v2262 = vunpack.c.l.b16 %v2191
    %v2263 = vunpack.c.l.b16 %v2192
    %v2264 = vunpack.c.l.b16 %v2193
    %v2265 = vunpack.c.l.b16 %v2194
    %v2266 = vunpack.c.l.b16 %v2195
    %v2267 = vunpack.c.l.b16 %v2196
    %v2268 = vunpack.c.l.b16 %v2197
    %v2269 = vunpack.c.l.b16 %v2198
    %v2270 = vunpack.c.l.b16 %v2199
    %v2271 = vunpack.c.l.b16 %v2200
    %v2272 = vunpack.c.l.b16 %v2201
    %v2273 = vunpack.c.l.b16 %v2202
    %v2274 = vunpack.c.l.b16 %v2203
    %v2275 = vunpack.c.l.b16 %v2204
    %v2276 = vpack.c.b16 %v2245, %v2244
    %v2277 = vpack.c.b16 %v2247, %v2246
    %v2278 = vpack.c.b16 %v2249, %v2248
    %v2279 = vpack.c.b16 %v2251, %v2250
    %v2280 = vpack.c.b16 %v2253, %v2252
    %v2281 = vpack.c.b16 %v2255, %v2254
    %v2282 = vpack.c.b16 %v2257, %v2256
    %v2283 = vpack.c.b16 %v2259, %v2258
    %v2284 = vpack.c.b16 %v2261, %v2260
    %v2285 = vpack.c.b16 %v2263, %v2262
    %v2286 = vpack.c.b16 %v2265, %v2264
    %v2287 = vpack.c.b16 %v2267, %v2266
    %v2288 = vpack.c.b16 %v2269, %v2268
    %v2289 = vpack.c.b16 %v2271, %v2270
    %v2290 = vpack.c.b16 %v2273, %v2272
    %v2291 = vpack.c.b16 %v2275, %v2274
    %2308 = vmatprep.subr.bf16.mxu0 0
    %2309 = vmatpush1.bf16.msra.mxu0 %v2276
    %2310 = vmatprep.subr.bf16.mxu0 0
    %2311 = vmatpush1.bf16.msra.mxu0 %v2277
    %2312 = vmatprep.subr.bf16.mxu0 0
    %2313 = vmatpush1.bf16.msra.mxu0 %v2278
    %2314 = vmatprep.subr.bf16.mxu0 0
    %2315 = vmatpush1.bf16.msra.mxu0 %v2279
    %2316 = vmatprep.subr.bf16.mxu0 0
    %2317 = vmatpush1.bf16.msra.mxu0 %v2280
    %2318 = vmatprep.subr.bf16.mxu0 0
    %2319 = vmatpush1.bf16.msra.mxu0 %v2281
    %2320 = vmatprep.subr.bf16.mxu0 0
    %2321 = vmatpush1.bf16.msra.mxu0 %v2282
    %2322 = vmatprep.subr.bf16.mxu0 0
    %2323 = vmatpush1.bf16.msra.mxu0 %v2283
    %2324 = vmatprep.subr.bf16.mxu0 0
    %2325 = vmatpush1.bf16.msra.mxu0 %v2284
    %2326 = vmatprep.subr.bf16.mxu0 0
    %2327 = vmatpush1.bf16.msra.mxu0 %v2285
    %2328 = vmatprep.subr.bf16.mxu0 0
    %2329 = vmatpush1.bf16.msra.mxu0 %v2286
    %2330 = vmatprep.subr.bf16.mxu0 0
    %2331 = vmatpush1.bf16.msra.mxu0 %v2287
    %2332 = vmatprep.subr.bf16.mxu0 0
    %2333 = vmatpush1.bf16.msra.mxu0 %v2288
    %2334 = vmatprep.subr.bf16.mxu0 0
    %2335 = vmatpush1.bf16.msra.mxu0 %v2289
    %2336 = vmatprep.subr.bf16.mxu0 0
    %2337 = vmatpush1.bf16.msra.mxu0 %v2290
    %2338 = vmatprep.subr.bf16.mxu0 0
    %2339 = vmatpush1.bf16.msra.mxu0 %v2291
    %2340 = vmatprep.mubr.bf16.mxu0 %v2172
    %2341 = vmatmul.mubr.bf16.gmra.mrb[0].mxu0 %v2171
    %v2342 = vpop.f32.mrb[0].mxu0
    %v2343 = vadd.f32 %v2210, %v2342
    %v2344 = vpop.f32.mrb[0].mxu0
    %v2345 = vpop.f32.mrb[0].mxu0
    %v2346 = vadd.f32 %v2210, %v2345
    %v2347 = vpop.f32.mrb[0].mxu0
    %2348 = vdwg.mxu0
    %v2349 = vxor.u32 %v2343, 2147483648
    %v2350 = vxor.u32 %v2346, 2147483648
    %v2351 = vmul.f32 %v2349, 1.442695
    %v2352 = vpow.pop %v2351
    %v2353 = vmul.f32 %v2350, 1.442695
    %v2354 = vpow.pop %v2353
    %v2355 = vadd.f32 %v2352, 1.0
    %v2356 = vadd.f32 %v2354, 1.0
    %v2357 = vrcp.pop %v2355
    %v2358 = vmul.f32 1.0, %v2357
    %v2359 = vrcp.pop %v2356
    %v2360 = vmul.f32 1.0, %v2359
    %vm2361 = vcmask 7168
    %2362 = vst.msk [vmem:[%s7] sm:$0xff] %vm2361, %v2358
    %2363 = vst.msk [vmem:[%s7 + $0x8] sm:$0xff] %vm2361, %v2360
    // Predicated region
    $region46: #{tpu_custom_call.1} parent=1 // pred_check
      _
    $region47: #{tpu_custom_call.1} parent=1 // pred_check_branch
      %2365 = sbr.rel (0) target = $region49
    $region48: #{tpu_custom_call.1} parent=1 // pred_region
      _
    $region49: #{tpu_custom_call.1} parent=1 // pred_fallthru
      _
    // Predicated region
    $region50: #{tpu_custom_call.1} parent=1 // pred_check
      _
    $region51: #{tpu_custom_call.1} parent=1 // pred_check_branch
      %2367 = sbr.rel (0) target = $region53
    $region52: #{tpu_custom_call.1} parent=1 // pred_region
      _
    $region53: #{tpu_custom_call.1} parent=1 // pred_fallthru
      _
    %2368 = vsyncpa [#allocation3], 1
    %2369 = vsyncpa [#allocation5], 1
    %2370 = vsyncpa [#allocation8], 1

</llo_original>
